<compile_context>
chip_gen: v5e
topology: v5e:2x2
jax: 0.10.0
libtpu: 0.0.40
codegen_flags: <defaults>
</compile_context>

<pallas_src>
import functools
import math

import jax
import jax.numpy as jnp
import numpy as np
from jax.experimental import pallas as pl
from jax.experimental.pallas import tpu as pltpu


_LN_EPS = 1e-5
_SQRT2 = math.sqrt(2.0)


def _layernorm(v, g, b):
    """PyTorch LayerNorm (biased variance, eps=1e-5); one-pass mean/var."""
    mu = jnp.mean(v, axis=-1, keepdims=True)
    ex2 = jnp.mean(v * v, axis=-1, keepdims=True)
    var = jnp.maximum(ex2 - mu * mu, 0.0)
    return (v - mu) * jax.lax.rsqrt(var + _LN_EPS) * g + b


def _erf(z):
    """erf via Abramowitz & Stegun 7.1.26 (|err| < 1.5e-7).

    Uses only exp / mul / add / where so it lowers cleanly in Mosaic on all
    TPU generations (no reliance on a lax.erf lowering rule)."""
    a1, a2, a3, a4, a5 = (0.254829592, -0.284496736, 1.421413741,
                          -1.453152027, 1.061405429)
    p = 0.3275911
    az = jnp.abs(z)
    t = 1.0 / (1.0 + p * az)
    poly = ((((a5 * t + a4) * t + a3) * t + a2) * t + a1) * t
    y = 1.0 - poly * jnp.exp(-az * az)
    return jnp.where(z < 0.0, -y, y)


def _gelu(v):
    # exact (erf-based) GELU, matching torch.nn.GELU() default
    return 0.5 * v * (1.0 + _erf(v / _SQRT2))


def _transformer_layer_kernel(
    x_ref,
    ln1g_ref, ln1b_ref,
    wqkv_ref, bqkv_ref,
    wo_ref, bo_ref,
    ln2g_ref, ln2b_ref,
    mlng_ref, mlnb_ref,
    w1_ref, b1_ref, w2_ref, b2_ref,
    o_ref,
    *, num_heads, compute_dtype,
):
    x = x_ref[0]                              # (S, E): this grid step's rows
    S, E = x.shape
    H = num_heads
    d = E // H
    cdt = compute_dtype

    # ---- norm1 + fused QKV projection (1/sqrt(d) pre-folded into Q cols) --
    y = _layernorm(x, ln1g_ref[...], ln1b_ref[...])
    qkv = jnp.dot(y.astype(cdt), wqkv_ref[...],
                  preferred_element_type=jnp.float32) + bqkv_ref[...]
    q = qkv[:, 0:E]
    k = qkv[:, E:2 * E]
    v = qkv[:, 2 * E:3 * E]

    # ---- multi-head self-attention, accumulated straight into Wo ----------
    # Each head's (S, d) context is contracted with its (d, E) Wo slice right
    # away, keeping the accumulator lane-dense (S, E): no d-wide masked
    # stores, no (B, S, E) ctx scratch.
    # TODO(synk): at production S (thousands) flash-tile the KV axis (online
    # softmax) and use a head-batched einsum instead of this static unroll.
    msa = jnp.zeros((S, E), jnp.float32)
    for h in range(H):                        # H is small; static unroll
        lo = h * d
        qh = q[:, lo:lo + d].astype(cdt)
        kh = k[:, lo:lo + d].astype(cdt)
        vh = v[:, lo:lo + d].astype(cdt)
        s = jnp.einsum('qd,kd->qk', qh, kh,
                       preferred_element_type=jnp.float32)
        s = s - jnp.max(s, axis=-1, keepdims=True)
        p = jnp.exp(s)
        # exact divide keeps the 1e-4 fidelity check; approx=True would move
        # it onto the otherwise-idle EUP slot at production sizes.
        p = p * pl.reciprocal(jnp.sum(p, axis=-1, keepdims=True), approx=False)
        ctx = jnp.dot(p.astype(cdt), vh, preferred_element_type=jnp.float32)
        msa = msa + jnp.dot(ctx.astype(cdt), wo_ref[lo:lo + d, :],
                            preferred_element_type=jnp.float32)
    x = x + msa + bo_ref[...]

    # ---- norm2 + MLP (LayerNorm -> Linear -> GELU -> Linear -> GELU) ------
    # W1/b1/W2 are zero-padded to a 128-wide hidden dim in prepare_params(),
    # so the hidden activation is lane-dense; padded lanes stay exactly zero.
    y = _layernorm(x, ln2g_ref[...], ln2b_ref[...])
    y = _layernorm(y, mlng_ref[...], mlnb_ref[...])
    h1 = _gelu(jnp.dot(y.astype(cdt), w1_ref[...],
                       preferred_element_type=jnp.float32) + b1_ref[...])
    y = _gelu(jnp.dot(h1.astype(cdt), w2_ref[...],
                      preferred_element_type=jnp.float32) + b2_ref[...])

    o_ref[0] = (x + y).astype(o_ref.dtype)


def prepare_params(params, num_heads, matmul_dtype=jnp.float32):
    """One-time parameter prep (outside the per-call path).

    - fuse Wq/Wk/Wv (+ biases) into a single (E, 3E) weight,
    - fold the 1/sqrt(d) attention scale into the Q columns and bq,
    - zero-pad the MLP hidden dim (== num_heads) up to a lane-dense 128,
    - optionally cast matmul weights to bf16 (accumulation stays f32).
    """
    E = params["wq"].shape[0]
    H = num_heads
    d = E // H
    scale = 1.0 / math.sqrt(d)
    hp = max(128, -(-H // 128) * 128)         # lane-dense hidden width

    wqkv = jnp.concatenate(
        [params["wq"] * scale, params["wk"], params["wv"]], axis=1)
    bqkv = jnp.concatenate(
        [params["bq"] * scale, params["bk"], params["bv"]], axis=1)

    w1 = jnp.zeros((E, hp), jnp.float32).at[:, :H].set(params["w1"])
    b1 = jnp.zeros((1, hp), jnp.float32).at[:, :H].set(params["b1"])
    w2 = jnp.zeros((hp, E), jnp.float32).at[:H, :].set(params["w2"])

    mm = lambda a: a.astype(matmul_dtype)
    return {
        "ln1_g": params["ln1_g"], "ln1_b": params["ln1_b"],
        "wqkv": mm(wqkv), "bqkv": bqkv,
        "wo": mm(params["wo"]), "bo": params["bo"],
        "ln2_g": params["ln2_g"], "ln2_b": params["ln2_b"],
        "mln_g": params["mln_g"], "mln_b": params["mln_b"],
        "w1": mm(w1), "b1": b1, "w2": mm(w2), "b2": params["b2"],
    }


def transformer_layer(x, kp, num_heads):
    """x: (B, S, E); kp: dict from prepare_params(); returns (B, S, E)."""
    B, S, E = x.shape
    H = num_heads
    assert E % H == 0, "embed_size must be divisible by num_heads"
    hp = kp["w1"].shape[1]
    compute_dtype = kp["wqkv"].dtype
    d = E // H

    def resident(shape):
        # constant block index -> DMA'd once, stays resident in VMEM
        return pl.BlockSpec(shape, lambda b: (0, 0))

    in_specs = [
        pl.BlockSpec((1, S, E), lambda b: (b, 0, 0)),   # x: one batch tile / step
        resident((1, E)), resident((1, E)),             # ln1 gamma/beta
        resident((E, 3 * E)), resident((1, 3 * E)),     # fused Wqkv, bqkv
        resident((E, E)), resident((1, E)),             # Wo, bo
        resident((1, E)), resident((1, E)),             # ln2 gamma/beta
        resident((1, E)), resident((1, E)),             # mlp-norm gamma/beta
        resident((E, hp)), resident((1, hp)),           # W1, b1 (lane-padded)
        resident((hp, E)), resident((1, E)),            # W2, b2
    ]

    kernel = functools.partial(_transformer_layer_kernel,
                               num_heads=H, compute_dtype=compute_dtype)

    # Advisory cost estimate for XLA scheduling around the custom call.
    flops = B * (2 * S * E * 3 * E            # fused QKV projection
                 + 4 * H * S * S * d          # scores + attn@V
                 + 2 * S * E * E              # per-head Wo accumulation
                 + 4 * S * E * hp)            # MLP (two matmuls)
    transcendentals = B * (H * S * S + S * (hp + E) + 3 * S)
    param_bytes = sum(int(np.prod(v.shape)) * v.dtype.itemsize
                      for v in kp.values())
    bytes_accessed = 2 * B * S * E * 4 + param_bytes

    return pl.pallas_call(
        kernel,
        out_shape=jax.ShapeDtypeStruct((B, S, E), x.dtype),
        grid=(B,),
        in_specs=in_specs,
        out_specs=pl.BlockSpec((1, S, E), lambda b: (b, 0, 0)),
        input_output_aliases={0: 0},          # x and out share one HBM buffer
        compiler_params=pltpu.CompilerParams(
            dimension_semantics=("parallel",),        # shard over v7x's 2 TCs
            vmem_limit_bytes=48 * 1024 * 1024),       # headroom vs v7x 64 MiB
        cost_estimate=pl.CostEstimate(
            flops=int(flops),
            transcendentals=int(transcendentals),
            bytes_accessed=int(bytes_accessed)),
    )(
        x,
        kp["ln1_g"], kp["ln1_b"],
        kp["wqkv"], kp["bqkv"],
        kp["wo"], kp["bo"],
        kp["ln2_g"], kp["ln2_b"],
        kp["mln_g"], kp["mln_b"],
        kp["w1"], kp["b1"], kp["w2"], kp["b2"],
    )


def reference_forward(x, p, num_heads):
    """Pure-JAX reference mirroring the PyTorch module exactly."""
    B, S, E = x.shape
    d = E // num_heads

    def ln(v, g, b):
        mu = jnp.mean(v, axis=-1, keepdims=True)
        var = jnp.mean((v - mu) ** 2, axis=-1, keepdims=True)
        return (v - mu) / jnp.sqrt(var + _LN_EPS) * g + b

    def gelu(v):
        return 0.5 * v * (1.0 + jax.lax.erf(v / _SQRT2))

    y = ln(x, p["ln1_g"], p["ln1_b"])
    q = y @ p["wq"] + p["bq"]
    k = y @ p["wk"] + p["bk"]
    v = y @ p["wv"] + p["bv"]
    qh = q.reshape(B, S, num_heads, d).transpose(0, 2, 1, 3)
    kh = k.reshape(B, S, num_heads, d).transpose(0, 2, 1, 3)
    vh = v.reshape(B, S, num_heads, d).transpose(0, 2, 1, 3)
    attn = jax.nn.softmax(qh @ kh.transpose(0, 1, 3, 2) / math.sqrt(d), axis=-1)
    ctx = (attn @ vh).transpose(0, 2, 1, 3).reshape(B, S, E)
    msa = ctx @ p["wo"] + p["bo"]
    x = x + msa

    y = ln(x, p["ln2_g"], p["ln2_b"])
    y = ln(y, p["mln_g"], p["mln_b"])
    y = gelu(y @ p["w1"] + p["b1"])
    y = gelu(y @ p["w2"] + p["b2"])
    return x + y


def make_params(key, embed_size, num_heads):
    E, H = embed_size, num_heads
    ks = jax.random.split(key, 12)
    f32 = jnp.float32

    def w(k, shape, fan_in):
        return (jax.random.normal(k, shape, f32) / math.sqrt(fan_in)).astype(f32)

    return {
        "ln1_g": jnp.ones((1, E), f32),
        "ln1_b": jnp.zeros((1, E), f32),
        "wq": w(ks[0], (E, E), E), "bq": 0.01 * jax.random.normal(ks[1], (1, E), f32),
        "wk": w(ks[2], (E, E), E), "bk": 0.01 * jax.random.normal(ks[3], (1, E), f32),
        "wv": w(ks[4], (E, E), E), "bv": 0.01 * jax.random.normal(ks[5], (1, E), f32),
        "wo": w(ks[6], (E, E), E), "bo": 0.01 * jax.random.normal(ks[7], (1, E), f32),
        "ln2_g": jnp.ones((1, E), f32),
        "ln2_b": jnp.zeros((1, E), f32),
        "mln_g": jnp.ones((1, E), f32),
        "mln_b": jnp.zeros((1, E), f32),
        "w1": w(ks[8], (E, H), E), "b1": 0.01 * jax.random.normal(ks[9], (1, H), f32),
        "w2": w(ks[10], (H, E), H), "b2": 0.01 * jax.random.normal(ks[11], (1, E), f32),
    }


if __name__ == "__main__":
    B, S, E, NUM_HEADS = 2, 8, 32, 4   # (batch, n_patches, embed_size, heads)

    key = jax.random.PRNGKey(0)
    kx, kparam = jax.random.split(key)
    x = jax.random.normal(kx, (B, S, E), jnp.float32)
    params = make_params(kparam, E, NUM_HEADS)

    # Reference computed first: the kernel aliases x with its output, so x's
    # buffer may be donated/overwritten by the pallas_call.
    ref = jax.block_until_ready(reference_forward(x, params, NUM_HEADS))

    # matmul_dtype=jnp.bfloat16 is the production setting on v6e/v7x (f32
    # accumulation is kept); f32 here preserves the 1e-4 fidelity check.
    kp = prepare_params(params, NUM_HEADS, matmul_dtype=jnp.float32)

    out = transformer_layer(x, kp, NUM_HEADS)
    out = jax.block_until_ready(out)

    assert out.shape == (B, S, E)
    np_out = np.asarray(out)
    np_ref = np.asarray(ref)
    assert np.allclose(np_out, np_ref, atol=1e-4, rtol=1e-4), (
        f"max abs err {np.max(np.abs(np_out - np_ref))}"
    )

    print("KERNEL_OK")
</pallas_src>

<mosaic_0001>
module attributes {stable_mosaic.version = 11 : i64} {
  func.func @_transformer_layer_kernel(%arg0: i32, %arg1: memref<1x8x32xf32, #tpu.memory_space<vmem>>, %arg2: memref<1x32xf32, #tpu.memory_space<vmem>>, %arg3: memref<1x32xf32, #tpu.memory_space<vmem>>, %arg4: memref<32x96xf32, #tpu.memory_space<vmem>>, %arg5: memref<1x96xf32, #tpu.memory_space<vmem>>, %arg6: memref<32x32xf32, #tpu.memory_space<vmem>>, %arg7: memref<1x32xf32, #tpu.memory_space<vmem>>, %arg8: memref<1x32xf32, #tpu.memory_space<vmem>>, %arg9: memref<1x32xf32, #tpu.memory_space<vmem>>, %arg10: memref<1x32xf32, #tpu.memory_space<vmem>>, %arg11: memref<1x32xf32, #tpu.memory_space<vmem>>, %arg12: memref<32x128xf32, #tpu.memory_space<vmem>>, %arg13: memref<1x128xf32, #tpu.memory_space<vmem>>, %arg14: memref<128x32xf32, #tpu.memory_space<vmem>>, %arg15: memref<1x32xf32, #tpu.memory_space<vmem>>, %arg16: memref<1x8x32xf32, #tpu.memory_space<vmem>>) attributes {dimension_semantics = [#tpu.dimension_semantics<parallel>], iteration_bounds = array<i64: 2>, scalar_prefetch = 0 : i64, scratch_operands = 0 : i64, tpu.core_type = #tpu.core_type<tc>, window_params = [{transform_indices = @transform_0, window_bounds = array<i64: 1, 8, 32>}, {pipeline_mode = #tpu.pipeline_mode<synchronous>, transform_indices = @transform_1, window_bounds = array<i64: 1, 32>}, {pipeline_mode = #tpu.pipeline_mode<synchronous>, transform_indices = @transform_2, window_bounds = array<i64: 1, 32>}, {pipeline_mode = #tpu.pipeline_mode<synchronous>, transform_indices = @transform_3, window_bounds = array<i64: 32, 96>}, {pipeline_mode = #tpu.pipeline_mode<synchronous>, transform_indices = @transform_4, window_bounds = array<i64: 1, 96>}, {pipeline_mode = #tpu.pipeline_mode<synchronous>, transform_indices = @transform_5, window_bounds = array<i64: 32, 32>}, {pipeline_mode = #tpu.pipeline_mode<synchronous>, transform_indices = @transform_6, window_bounds = array<i64: 1, 32>}, {pipeline_mode = #tpu.pipeline_mode<synchronous>, transform_indices = @transform_7, window_bounds = array<i64: 1, 32>}, {pipeline_mode = #tpu.pipeline_mode<synchronous>, transform_indices = @transform_8, window_bounds = array<i64: 1, 32>}, {pipeline_mode = #tpu.pipeline_mode<synchronous>, transform_indices = @transform_9, window_bounds = array<i64: 1, 32>}, {pipeline_mode = #tpu.pipeline_mode<synchronous>, transform_indices = @transform_10, window_bounds = array<i64: 1, 32>}, {pipeline_mode = #tpu.pipeline_mode<synchronous>, transform_indices = @transform_11, window_bounds = array<i64: 32, 128>}, {pipeline_mode = #tpu.pipeline_mode<synchronous>, transform_indices = @transform_12, window_bounds = array<i64: 1, 128>}, {pipeline_mode = #tpu.pipeline_mode<synchronous>, transform_indices = @transform_13, window_bounds = array<i64: 128, 32>}, {pipeline_mode = #tpu.pipeline_mode<synchronous>, transform_indices = @transform_14, window_bounds = array<i64: 1, 32>}, {transform_indices = @transform_15, window_bounds = array<i64: 1, 8, 32>}]} {
    %c0 = arith.constant 0 : index
    %c0_0 = arith.constant 0 : index
    %c0_1 = arith.constant 0 : index
    %0 = vector.load %arg1[%c0, %c0_0, %c0_1] : memref<1x8x32xf32, #tpu.memory_space<vmem>>, vector<1x8x32xf32>
    %1 = vector.shape_cast %0 : vector<1x8x32xf32> to vector<8x32xf32>
    %c0_2 = arith.constant 0 : index
    %c0_3 = arith.constant 0 : index
    %2 = vector.load %arg2[%c0_2, %c0_3] : memref<1x32xf32, #tpu.memory_space<vmem>>, vector<1x32xf32>
    %c0_4 = arith.constant 0 : index
    %c0_5 = arith.constant 0 : index
    %3 = vector.load %arg3[%c0_4, %c0_5] : memref<1x32xf32, #tpu.memory_space<vmem>>, vector<1x32xf32>
    %cst = arith.constant dense<0.000000e+00> : vector<8xf32>
    %4 = vector.multi_reduction <add>, %1, %cst [1] : vector<8x32xf32> to vector<8xf32>
    %5 = vector.shape_cast %4 : vector<8xf32> to vector<8x1xf32>
    %cst_6 = arith.constant 3.200000e+01 : f32
    %6 = vector.broadcast %cst_6 : f32 to vector<8x1xf32>
    %7 = arith.divf %5, %6 : vector<8x1xf32>
    %8 = arith.mulf %1, %1 : vector<8x32xf32>
    %cst_7 = arith.constant dense<0.000000e+00> : vector<8xf32>
    %9 = vector.multi_reduction <add>, %8, %cst_7 [1] : vector<8x32xf32> to vector<8xf32>
    %10 = vector.shape_cast %9 : vector<8xf32> to vector<8x1xf32>
    %cst_8 = arith.constant 3.200000e+01 : f32
    %11 = vector.broadcast %cst_8 : f32 to vector<8x1xf32>
    %12 = arith.divf %10, %11 : vector<8x1xf32>
    %13 = arith.mulf %7, %7 : vector<8x1xf32>
    %14 = arith.subf %12, %13 : vector<8x1xf32>
    %cst_9 = arith.constant 0.000000e+00 : f32
    %15 = vector.broadcast %cst_9 : f32 to vector<8x1xf32>
    %16 = arith.maximumf %14, %15 : vector<8x1xf32>
    %17 = vector.broadcast %7 : vector<8x1xf32> to vector<8x32xf32>
    %18 = arith.subf %1, %17 : vector<8x32xf32>
    %cst_10 = arith.constant 9.99999974E-6 : f32
    %19 = vector.broadcast %cst_10 : f32 to vector<8x1xf32>
    %20 = arith.addf %16, %19 : vector<8x1xf32>
    %21 = math.rsqrt %20 : vector<8x1xf32>
    %22 = vector.broadcast %21 : vector<8x1xf32> to vector<8x32xf32>
    %23 = arith.mulf %18, %22 : vector<8x32xf32>
    %24 = vector.broadcast %2 : vector<1x32xf32> to vector<8x32xf32>
    %25 = arith.mulf %23, %24 : vector<8x32xf32>
    %26 = vector.broadcast %3 : vector<1x32xf32> to vector<8x32xf32>
    %27 = arith.addf %25, %26 : vector<8x32xf32>
    %c0_11 = arith.constant 0 : index
    %c0_12 = arith.constant 0 : index
    %28 = vector.load %arg4[%c0_11, %c0_12] : memref<32x96xf32, #tpu.memory_space<vmem>>, vector<32x96xf32>
    %cst_13 = arith.constant dense<0.000000e+00> : vector<8x96xf32>
    %29 = tpu.matmul %27, %28, %cst_13 {dimension_numbers = #tpu.dot_dimension_numbers<[1], [0], [0], [1], [0, 0, 1, 1], [], []>} : vector<8x32xf32>, vector<32x96xf32>, vector<8x96xf32> -> vector<8x96xf32>
    %c0_14 = arith.constant 0 : index
    %c0_15 = arith.constant 0 : index
    %30 = vector.load %arg5[%c0_14, %c0_15] : memref<1x96xf32, #tpu.memory_space<vmem>>, vector<1x96xf32>
    %31 = vector.broadcast %30 : vector<1x96xf32> to vector<8x96xf32>
    %32 = arith.addf %29, %31 : vector<8x96xf32>
    %33 = vector.extract_strided_slice %32 {offsets = [0, 0], sizes = [8, 32], strides = [1, 1]} : vector<8x96xf32> to vector<8x32xf32>
    %34 = vector.extract_strided_slice %32 {offsets = [0, 32], sizes = [8, 32], strides = [1, 1]} : vector<8x96xf32> to vector<8x32xf32>
    %35 = vector.extract_strided_slice %32 {offsets = [0, 64], sizes = [8, 32], strides = [1, 1]} : vector<8x96xf32> to vector<8x32xf32>
    %cst_16 = arith.constant 0.000000e+00 : f32
    %36 = vector.broadcast %cst_16 : f32 to vector<8x32xf32>
    %37 = vector.extract_strided_slice %33 {offsets = [0, 0], sizes = [8, 8], strides = [1, 1]} : vector<8x32xf32> to vector<8x8xf32>
    %38 = vector.extract_strided_slice %34 {offsets = [0, 0], sizes = [8, 8], strides = [1, 1]} : vector<8x32xf32> to vector<8x8xf32>
    %39 = vector.extract_strided_slice %35 {offsets = [0, 0], sizes = [8, 8], strides = [1, 1]} : vector<8x32xf32> to vector<8x8xf32>
    "tpu.trace_start"() <{level = 10 : i32, message = "qd,kd->qk"}> : () -> ()
    %cst_17 = arith.constant dense<0.000000e+00> : vector<8x8xf32>
    %40 = tpu.matmul %37, %38, %cst_17 {dimension_numbers = #tpu.dot_dimension_numbers<[1], [1], [0], [0], [0, 0, 1, 0], [], []>} : vector<8x8xf32>, vector<8x8xf32>, vector<8x8xf32> -> vector<8x8xf32>
    "tpu.trace_stop"() : () -> ()
    %cst_18 = arith.constant dense<0xFF800000> : vector<8xf32>
    %41 = vector.multi_reduction <maximumf>, %40, %cst_18 [1] : vector<8x8xf32> to vector<8xf32>
    %42 = vector.shape_cast %41 : vector<8xf32> to vector<8x1xf32>
    %43 = vector.broadcast %42 : vector<8x1xf32> to vector<8x8xf32>
    %44 = arith.subf %40, %43 : vector<8x8xf32>
    %45 = math.exp %44 : vector<8x8xf32>
    %cst_19 = arith.constant dense<0.000000e+00> : vector<8xf32>
    %46 = vector.multi_reduction <add>, %45, %cst_19 [1] : vector<8x8xf32> to vector<8xf32>
    %47 = vector.shape_cast %46 : vector<8xf32> to vector<8x1xf32>
    %48 = tpu.reciprocal %47 : vector<8x1xf32> -> vector<8x1xf32>
    %49 = vector.broadcast %48 : vector<8x1xf32> to vector<8x8xf32>
    %50 = arith.mulf %45, %49 : vector<8x8xf32>
    %cst_20 = arith.constant dense<0.000000e+00> : vector<8x8xf32>
    %51 = tpu.matmul %50, %39, %cst_20 {dimension_numbers = #tpu.dot_dimension_numbers<[1], [0], [0], [1], [0, 0, 1, 1], [], []>} : vector<8x8xf32>, vector<8x8xf32>, vector<8x8xf32> -> vector<8x8xf32>
    %c0_21 = arith.constant 0 : index
    %c0_22 = arith.constant 0 : index
    %52 = vector.load %arg6[%c0_21, %c0_22] : memref<32x32xf32, #tpu.memory_space<vmem>>, vector<8x32xf32>
    %cst_23 = arith.constant dense<0.000000e+00> : vector<8x32xf32>
    %53 = tpu.matmul %51, %52, %cst_23 {dimension_numbers = #tpu.dot_dimension_numbers<[1], [0], [0], [1], [0, 0, 1, 1], [], []>} : vector<8x8xf32>, vector<8x32xf32>, vector<8x32xf32> -> vector<8x32xf32>
    %54 = arith.addf %36, %53 : vector<8x32xf32>
    %55 = vector.extract_strided_slice %33 {offsets = [0, 8], sizes = [8, 8], strides = [1, 1]} : vector<8x32xf32> to vector<8x8xf32>
    %56 = vector.extract_strided_slice %34 {offsets = [0, 8], sizes = [8, 8], strides = [1, 1]} : vector<8x32xf32> to vector<8x8xf32>
    %57 = vector.extract_strided_slice %35 {offsets = [0, 8], sizes = [8, 8], strides = [1, 1]} : vector<8x32xf32> to vector<8x8xf32>
    "tpu.trace_start"() <{level = 10 : i32, message = "qd,kd->qk"}> : () -> ()
    %cst_24 = arith.constant dense<0.000000e+00> : vector<8x8xf32>
    %58 = tpu.matmul %55, %56, %cst_24 {dimension_numbers = #tpu.dot_dimension_numbers<[1], [1], [0], [0], [0, 0, 1, 0], [], []>} : vector<8x8xf32>, vector<8x8xf32>, vector<8x8xf32> -> vector<8x8xf32>
    "tpu.trace_stop"() : () -> ()
    %cst_25 = arith.constant dense<0xFF800000> : vector<8xf32>
    %59 = vector.multi_reduction <maximumf>, %58, %cst_25 [1] : vector<8x8xf32> to vector<8xf32>
    %60 = vector.shape_cast %59 : vector<8xf32> to vector<8x1xf32>
    %61 = vector.broadcast %60 : vector<8x1xf32> to vector<8x8xf32>
    %62 = arith.subf %58, %61 : vector<8x8xf32>
    %63 = math.exp %62 : vector<8x8xf32>
    %cst_26 = arith.constant dense<0.000000e+00> : vector<8xf32>
    %64 = vector.multi_reduction <add>, %63, %cst_26 [1] : vector<8x8xf32> to vector<8xf32>
    %65 = vector.shape_cast %64 : vector<8xf32> to vector<8x1xf32>
    %66 = tpu.reciprocal %65 : vector<8x1xf32> -> vector<8x1xf32>
    %67 = vector.broadcast %66 : vector<8x1xf32> to vector<8x8xf32>
    %68 = arith.mulf %63, %67 : vector<8x8xf32>
    %cst_27 = arith.constant dense<0.000000e+00> : vector<8x8xf32>
    %69 = tpu.matmul %68, %57, %cst_27 {dimension_numbers = #tpu.dot_dimension_numbers<[1], [0], [0], [1], [0, 0, 1, 1], [], []>} : vector<8x8xf32>, vector<8x8xf32>, vector<8x8xf32> -> vector<8x8xf32>
    %c8 = arith.constant 8 : index
    %c0_28 = arith.constant 0 : index
    %70 = vector.load %arg6[%c8, %c0_28] : memref<32x32xf32, #tpu.memory_space<vmem>>, vector<8x32xf32>
    %cst_29 = arith.constant dense<0.000000e+00> : vector<8x32xf32>
    %71 = tpu.matmul %69, %70, %cst_29 {dimension_numbers = #tpu.dot_dimension_numbers<[1], [0], [0], [1], [0, 0, 1, 1], [], []>} : vector<8x8xf32>, vector<8x32xf32>, vector<8x32xf32> -> vector<8x32xf32>
    %72 = arith.addf %54, %71 : vector<8x32xf32>
    %73 = vector.extract_strided_slice %33 {offsets = [0, 16], sizes = [8, 8], strides = [1, 1]} : vector<8x32xf32> to vector<8x8xf32>
    %74 = vector.extract_strided_slice %34 {offsets = [0, 16], sizes = [8, 8], strides = [1, 1]} : vector<8x32xf32> to vector<8x8xf32>
    %75 = vector.extract_strided_slice %35 {offsets = [0, 16], sizes = [8, 8], strides = [1, 1]} : vector<8x32xf32> to vector<8x8xf32>
    "tpu.trace_start"() <{level = 10 : i32, message = "qd,kd->qk"}> : () -> ()
    %cst_30 = arith.constant dense<0.000000e+00> : vector<8x8xf32>
    %76 = tpu.matmul %73, %74, %cst_30 {dimension_numbers = #tpu.dot_dimension_numbers<[1], [1], [0], [0], [0, 0, 1, 0], [], []>} : vector<8x8xf32>, vector<8x8xf32>, vector<8x8xf32> -> vector<8x8xf32>
    "tpu.trace_stop"() : () -> ()
    %cst_31 = arith.constant dense<0xFF800000> : vector<8xf32>
    %77 = vector.multi_reduction <maximumf>, %76, %cst_31 [1] : vector<8x8xf32> to vector<8xf32>
    %78 = vector.shape_cast %77 : vector<8xf32> to vector<8x1xf32>
    %79 = vector.broadcast %78 : vector<8x1xf32> to vector<8x8xf32>
    %80 = arith.subf %76, %79 : vector<8x8xf32>
    %81 = math.exp %80 : vector<8x8xf32>
    %cst_32 = arith.constant dense<0.000000e+00> : vector<8xf32>
    %82 = vector.multi_reduction <add>, %81, %cst_32 [1] : vector<8x8xf32> to vector<8xf32>
    %83 = vector.shape_cast %82 : vector<8xf32> to vector<8x1xf32>
    %84 = tpu.reciprocal %83 : vector<8x1xf32> -> vector<8x1xf32>
    %85 = vector.broadcast %84 : vector<8x1xf32> to vector<8x8xf32>
    %86 = arith.mulf %81, %85 : vector<8x8xf32>
    %cst_33 = arith.constant dense<0.000000e+00> : vector<8x8xf32>
    %87 = tpu.matmul %86, %75, %cst_33 {dimension_numbers = #tpu.dot_dimension_numbers<[1], [0], [0], [1], [0, 0, 1, 1], [], []>} : vector<8x8xf32>, vector<8x8xf32>, vector<8x8xf32> -> vector<8x8xf32>
    %c16 = arith.constant 16 : index
    %c0_34 = arith.constant 0 : index
    %88 = vector.load %arg6[%c16, %c0_34] : memref<32x32xf32, #tpu.memory_space<vmem>>, vector<8x32xf32>
    %cst_35 = arith.constant dense<0.000000e+00> : vector<8x32xf32>
    %89 = tpu.matmul %87, %88, %cst_35 {dimension_numbers = #tpu.dot_dimension_numbers<[1], [0], [0], [1], [0, 0, 1, 1], [], []>} : vector<8x8xf32>, vector<8x32xf32>, vector<8x32xf32> -> vector<8x32xf32>
    %90 = arith.addf %72, %89 : vector<8x32xf32>
    %91 = vector.extract_strided_slice %33 {offsets = [0, 24], sizes = [8, 8], strides = [1, 1]} : vector<8x32xf32> to vector<8x8xf32>
    %92 = vector.extract_strided_slice %34 {offsets = [0, 24], sizes = [8, 8], strides = [1, 1]} : vector<8x32xf32> to vector<8x8xf32>
    %93 = vector.extract_strided_slice %35 {offsets = [0, 24], sizes = [8, 8], strides = [1, 1]} : vector<8x32xf32> to vector<8x8xf32>
    "tpu.trace_start"() <{level = 10 : i32, message = "qd,kd->qk"}> : () -> ()
    %cst_36 = arith.constant dense<0.000000e+00> : vector<8x8xf32>
    %94 = tpu.matmul %91, %92, %cst_36 {dimension_numbers = #tpu.dot_dimension_numbers<[1], [1], [0], [0], [0, 0, 1, 0], [], []>} : vector<8x8xf32>, vector<8x8xf32>, vector<8x8xf32> -> vector<8x8xf32>
    "tpu.trace_stop"() : () -> ()
    %cst_37 = arith.constant dense<0xFF800000> : vector<8xf32>
    %95 = vector.multi_reduction <maximumf>, %94, %cst_37 [1] : vector<8x8xf32> to vector<8xf32>
    %96 = vector.shape_cast %95 : vector<8xf32> to vector<8x1xf32>
    %97 = vector.broadcast %96 : vector<8x1xf32> to vector<8x8xf32>
    %98 = arith.subf %94, %97 : vector<8x8xf32>
    %99 = math.exp %98 : vector<8x8xf32>
    %cst_38 = arith.constant dense<0.000000e+00> : vector<8xf32>
    %100 = vector.multi_reduction <add>, %99, %cst_38 [1] : vector<8x8xf32> to vector<8xf32>
    %101 = vector.shape_cast %100 : vector<8xf32> to vector<8x1xf32>
    %102 = tpu.reciprocal %101 : vector<8x1xf32> -> vector<8x1xf32>
    %103 = vector.broadcast %102 : vector<8x1xf32> to vector<8x8xf32>
    %104 = arith.mulf %99, %103 : vector<8x8xf32>
    %cst_39 = arith.constant dense<0.000000e+00> : vector<8x8xf32>
    %105 = tpu.matmul %104, %93, %cst_39 {dimension_numbers = #tpu.dot_dimension_numbers<[1], [0], [0], [1], [0, 0, 1, 1], [], []>} : vector<8x8xf32>, vector<8x8xf32>, vector<8x8xf32> -> vector<8x8xf32>
    %c24 = arith.constant 24 : index
    %c0_40 = arith.constant 0 : index
    %106 = vector.load %arg6[%c24, %c0_40] : memref<32x32xf32, #tpu.memory_space<vmem>>, vector<8x32xf32>
    %cst_41 = arith.constant dense<0.000000e+00> : vector<8x32xf32>
    %107 = tpu.matmul %105, %106, %cst_41 {dimension_numbers = #tpu.dot_dimension_numbers<[1], [0], [0], [1], [0, 0, 1, 1], [], []>} : vector<8x8xf32>, vector<8x32xf32>, vector<8x32xf32> -> vector<8x32xf32>
    %108 = arith.addf %90, %107 : vector<8x32xf32>
    %109 = arith.addf %1, %108 : vector<8x32xf32>
    %c0_42 = arith.constant 0 : index
    %c0_43 = arith.constant 0 : index
    %110 = vector.load %arg7[%c0_42, %c0_43] : memref<1x32xf32, #tpu.memory_space<vmem>>, vector<1x32xf32>
    %111 = vector.broadcast %110 : vector<1x32xf32> to vector<8x32xf32>
    %112 = arith.addf %109, %111 : vector<8x32xf32>
    %c0_44 = arith.constant 0 : index
    %c0_45 = arith.constant 0 : index
    %113 = vector.load %arg8[%c0_44, %c0_45] : memref<1x32xf32, #tpu.memory_space<vmem>>, vector<1x32xf32>
    %c0_46 = arith.constant 0 : index
    %c0_47 = arith.constant 0 : index
    %114 = vector.load %arg9[%c0_46, %c0_47] : memref<1x32xf32, #tpu.memory_space<vmem>>, vector<1x32xf32>
    %cst_48 = arith.constant dense<0.000000e+00> : vector<8xf32>
    %115 = vector.multi_reduction <add>, %112, %cst_48 [1] : vector<8x32xf32> to vector<8xf32>
    %116 = vector.shape_cast %115 : vector<8xf32> to vector<8x1xf32>
    %cst_49 = arith.constant 3.200000e+01 : f32
    %117 = vector.broadcast %cst_49 : f32 to vector<8x1xf32>
    %118 = arith.divf %116, %117 : vector<8x1xf32>
    %119 = arith.mulf %112, %112 : vector<8x32xf32>
    %cst_50 = arith.constant dense<0.000000e+00> : vector<8xf32>
    %120 = vector.multi_reduction <add>, %119, %cst_50 [1] : vector<8x32xf32> to vector<8xf32>
    %121 = vector.shape_cast %120 : vector<8xf32> to vector<8x1xf32>
    %cst_51 = arith.constant 3.200000e+01 : f32
    %122 = vector.broadcast %cst_51 : f32 to vector<8x1xf32>
    %123 = arith.divf %121, %122 : vector<8x1xf32>
    %124 = arith.mulf %118, %118 : vector<8x1xf32>
    %125 = arith.subf %123, %124 : vector<8x1xf32>
    %cst_52 = arith.constant 0.000000e+00 : f32
    %126 = vector.broadcast %cst_52 : f32 to vector<8x1xf32>
    %127 = arith.maximumf %125, %126 : vector<8x1xf32>
    %128 = vector.broadcast %118 : vector<8x1xf32> to vector<8x32xf32>
    %129 = arith.subf %112, %128 : vector<8x32xf32>
    %cst_53 = arith.constant 9.99999974E-6 : f32
    %130 = vector.broadcast %cst_53 : f32 to vector<8x1xf32>
    %131 = arith.addf %127, %130 : vector<8x1xf32>
    %132 = math.rsqrt %131 : vector<8x1xf32>
    %133 = vector.broadcast %132 : vector<8x1xf32> to vector<8x32xf32>
    %134 = arith.mulf %129, %133 : vector<8x32xf32>
    %135 = vector.broadcast %113 : vector<1x32xf32> to vector<8x32xf32>
    %136 = arith.mulf %134, %135 : vector<8x32xf32>
    %137 = vector.broadcast %114 : vector<1x32xf32> to vector<8x32xf32>
    %138 = arith.addf %136, %137 : vector<8x32xf32>
    %c0_54 = arith.constant 0 : index
    %c0_55 = arith.constant 0 : index
    %139 = vector.load %arg10[%c0_54, %c0_55] : memref<1x32xf32, #tpu.memory_space<vmem>>, vector<1x32xf32>
    %c0_56 = arith.constant 0 : index
    %c0_57 = arith.constant 0 : index
    %140 = vector.load %arg11[%c0_56, %c0_57] : memref<1x32xf32, #tpu.memory_space<vmem>>, vector<1x32xf32>
    %cst_58 = arith.constant dense<0.000000e+00> : vector<8xf32>
    %141 = vector.multi_reduction <add>, %138, %cst_58 [1] : vector<8x32xf32> to vector<8xf32>
    %142 = vector.shape_cast %141 : vector<8xf32> to vector<8x1xf32>
    %cst_59 = arith.constant 3.200000e+01 : f32
    %143 = vector.broadcast %cst_59 : f32 to vector<8x1xf32>
    %144 = arith.divf %142, %143 : vector<8x1xf32>
    %145 = arith.mulf %138, %138 : vector<8x32xf32>
    %cst_60 = arith.constant dense<0.000000e+00> : vector<8xf32>
    %146 = vector.multi_reduction <add>, %145, %cst_60 [1] : vector<8x32xf32> to vector<8xf32>
    %147 = vector.shape_cast %146 : vector<8xf32> to vector<8x1xf32>
    %cst_61 = arith.constant 3.200000e+01 : f32
    %148 = vector.broadcast %cst_61 : f32 to vector<8x1xf32>
    %149 = arith.divf %147, %148 : vector<8x1xf32>
    %150 = arith.mulf %144, %144 : vector<8x1xf32>
    %151 = arith.subf %149, %150 : vector<8x1xf32>
    %cst_62 = arith.constant 0.000000e+00 : f32
    %152 = vector.broadcast %cst_62 : f32 to vector<8x1xf32>
    %153 = arith.maximumf %151, %152 : vector<8x1xf32>
    %154 = vector.broadcast %144 : vector<8x1xf32> to vector<8x32xf32>
    %155 = arith.subf %138, %154 : vector<8x32xf32>
    %cst_63 = arith.constant 9.99999974E-6 : f32
    %156 = vector.broadcast %cst_63 : f32 to vector<8x1xf32>
    %157 = arith.addf %153, %156 : vector<8x1xf32>
    %158 = math.rsqrt %157 : vector<8x1xf32>
    %159 = vector.broadcast %158 : vector<8x1xf32> to vector<8x32xf32>
    %160 = arith.mulf %155, %159 : vector<8x32xf32>
    %161 = vector.broadcast %139 : vector<1x32xf32> to vector<8x32xf32>
    %162 = arith.mulf %160, %161 : vector<8x32xf32>
    %163 = vector.broadcast %140 : vector<1x32xf32> to vector<8x32xf32>
    %164 = arith.addf %162, %163 : vector<8x32xf32>
    %c0_64 = arith.constant 0 : index
    %c0_65 = arith.constant 0 : index
    %165 = vector.load %arg12[%c0_64, %c0_65] : memref<32x128xf32, #tpu.memory_space<vmem>>, vector<32x128xf32>
    %cst_66 = arith.constant dense<0.000000e+00> : vector<8x128xf32>
    %166 = tpu.matmul %164, %165, %cst_66 {dimension_numbers = #tpu.dot_dimension_numbers<[1], [0], [0], [1], [0, 0, 1, 1], [], []>} : vector<8x32xf32>, vector<32x128xf32>, vector<8x128xf32> -> vector<8x128xf32>
    %c0_67 = arith.constant 0 : index
    %c0_68 = arith.constant 0 : index
    %167 = vector.load %arg13[%c0_67, %c0_68] : memref<1x128xf32, #tpu.memory_space<vmem>>, vector<1x128xf32>
    %168 = vector.broadcast %167 : vector<1x128xf32> to vector<8x128xf32>
    %169 = arith.addf %166, %168 : vector<8x128xf32>
    %cst_69 = arith.constant 5.000000e-01 : f32
    %170 = vector.broadcast %cst_69 : f32 to vector<8x128xf32>
    %171 = arith.mulf %170, %169 : vector<8x128xf32>
    %cst_70 = arith.constant 1.41421354 : f32
    %172 = vector.broadcast %cst_70 : f32 to vector<8x128xf32>
    %173 = arith.divf %169, %172 : vector<8x128xf32>
    %174 = math.absf %173 : vector<8x128xf32>
    %cst_71 = arith.constant 0.327591091 : f32
    %175 = vector.broadcast %cst_71 : f32 to vector<8x128xf32>
    %176 = arith.mulf %175, %174 : vector<8x128xf32>
    %cst_72 = arith.constant 1.000000e+00 : f32
    %177 = vector.broadcast %cst_72 : f32 to vector<8x128xf32>
    %178 = arith.addf %177, %176 : vector<8x128xf32>
    %cst_73 = arith.constant 1.000000e+00 : f32
    %179 = vector.broadcast %cst_73 : f32 to vector<8x128xf32>
    %180 = arith.divf %179, %178 : vector<8x128xf32>
    %cst_74 = arith.constant 1.06140542 : f32
    %181 = vector.broadcast %cst_74 : f32 to vector<8x128xf32>
    %182 = arith.mulf %181, %180 : vector<8x128xf32>
    %cst_75 = arith.constant -1.45315206 : f32
    %183 = vector.broadcast %cst_75 : f32 to vector<8x128xf32>
    %184 = arith.addf %182, %183 : vector<8x128xf32>
    %185 = arith.mulf %184, %180 : vector<8x128xf32>
    %cst_76 = arith.constant 1.42141378 : f32
    %186 = vector.broadcast %cst_76 : f32 to vector<8x128xf32>
    %187 = arith.addf %185, %186 : vector<8x128xf32>
    %188 = arith.mulf %187, %180 : vector<8x128xf32>
    %cst_77 = arith.constant -0.284496725 : f32
    %189 = vector.broadcast %cst_77 : f32 to vector<8x128xf32>
    %190 = arith.addf %188, %189 : vector<8x128xf32>
    %191 = arith.mulf %190, %180 : vector<8x128xf32>
    %cst_78 = arith.constant 0.254829586 : f32
    %192 = vector.broadcast %cst_78 : f32 to vector<8x128xf32>
    %193 = arith.addf %191, %192 : vector<8x128xf32>
    %194 = arith.mulf %193, %180 : vector<8x128xf32>
    %cst_79 = arith.constant 0.000000e+00 : f32
    %195 = vector.broadcast %cst_79 : f32 to vector<8x128xf32>
    %196 = arith.subf %195, %174 : vector<8x128xf32>
    %197 = arith.mulf %196, %174 : vector<8x128xf32>
    %198 = math.exp %197 : vector<8x128xf32>
    %199 = arith.mulf %194, %198 : vector<8x128xf32>
    %cst_80 = arith.constant 1.000000e+00 : f32
    %200 = vector.broadcast %cst_80 : f32 to vector<8x128xf32>
    %201 = arith.subf %200, %199 : vector<8x128xf32>
    %cst_81 = arith.constant 0.000000e+00 : f32
    %202 = vector.broadcast %cst_81 : f32 to vector<8x128xf32>
    %203 = arith.cmpf olt, %173, %202 : vector<8x128xf32>
    %cst_82 = arith.constant 0.000000e+00 : f32
    %204 = vector.broadcast %cst_82 : f32 to vector<8x128xf32>
    %205 = arith.subf %204, %201 : vector<8x128xf32>
    %206 = arith.select %203, %205, %201 : vector<8x128xi1>, vector<8x128xf32>
    %cst_83 = arith.constant 1.000000e+00 : f32
    %207 = vector.broadcast %cst_83 : f32 to vector<8x128xf32>
    %208 = arith.addf %207, %206 : vector<8x128xf32>
    %209 = arith.mulf %171, %208 : vector<8x128xf32>
    %c0_84 = arith.constant 0 : index
    %c0_85 = arith.constant 0 : index
    %210 = vector.load %arg14[%c0_84, %c0_85] : memref<128x32xf32, #tpu.memory_space<vmem>>, vector<128x32xf32>
    %cst_86 = arith.constant dense<0.000000e+00> : vector<8x32xf32>
    %211 = tpu.matmul %209, %210, %cst_86 {dimension_numbers = #tpu.dot_dimension_numbers<[1], [0], [0], [1], [0, 0, 1, 1], [], []>} : vector<8x128xf32>, vector<128x32xf32>, vector<8x32xf32> -> vector<8x32xf32>
    %c0_87 = arith.constant 0 : index
    %c0_88 = arith.constant 0 : index
    %212 = vector.load %arg15[%c0_87, %c0_88] : memref<1x32xf32, #tpu.memory_space<vmem>>, vector<1x32xf32>
    %213 = vector.broadcast %212 : vector<1x32xf32> to vector<8x32xf32>
    %214 = arith.addf %211, %213 : vector<8x32xf32>
    %cst_89 = arith.constant 5.000000e-01 : f32
    %215 = vector.broadcast %cst_89 : f32 to vector<8x32xf32>
    %216 = arith.mulf %215, %214 : vector<8x32xf32>
    %cst_90 = arith.constant 1.41421354 : f32
    %217 = vector.broadcast %cst_90 : f32 to vector<8x32xf32>
    %218 = arith.divf %214, %217 : vector<8x32xf32>
    %219 = math.absf %218 : vector<8x32xf32>
    %cst_91 = arith.constant 0.327591091 : f32
    %220 = vector.broadcast %cst_91 : f32 to vector<8x32xf32>
    %221 = arith.mulf %220, %219 : vector<8x32xf32>
    %cst_92 = arith.constant 1.000000e+00 : f32
    %222 = vector.broadcast %cst_92 : f32 to vector<8x32xf32>
    %223 = arith.addf %222, %221 : vector<8x32xf32>
    %cst_93 = arith.constant 1.000000e+00 : f32
    %224 = vector.broadcast %cst_93 : f32 to vector<8x32xf32>
    %225 = arith.divf %224, %223 : vector<8x32xf32>
    %cst_94 = arith.constant 1.06140542 : f32
    %226 = vector.broadcast %cst_94 : f32 to vector<8x32xf32>
    %227 = arith.mulf %226, %225 : vector<8x32xf32>
    %cst_95 = arith.constant -1.45315206 : f32
    %228 = vector.broadcast %cst_95 : f32 to vector<8x32xf32>
    %229 = arith.addf %227, %228 : vector<8x32xf32>
    %230 = arith.mulf %229, %225 : vector<8x32xf32>
    %cst_96 = arith.constant 1.42141378 : f32
    %231 = vector.broadcast %cst_96 : f32 to vector<8x32xf32>
    %232 = arith.addf %230, %231 : vector<8x32xf32>
    %233 = arith.mulf %232, %225 : vector<8x32xf32>
    %cst_97 = arith.constant -0.284496725 : f32
    %234 = vector.broadcast %cst_97 : f32 to vector<8x32xf32>
    %235 = arith.addf %233, %234 : vector<8x32xf32>
    %236 = arith.mulf %235, %225 : vector<8x32xf32>
    %cst_98 = arith.constant 0.254829586 : f32
    %237 = vector.broadcast %cst_98 : f32 to vector<8x32xf32>
    %238 = arith.addf %236, %237 : vector<8x32xf32>
    %239 = arith.mulf %238, %225 : vector<8x32xf32>
    %cst_99 = arith.constant 0.000000e+00 : f32
    %240 = vector.broadcast %cst_99 : f32 to vector<8x32xf32>
    %241 = arith.subf %240, %219 : vector<8x32xf32>
    %242 = arith.mulf %241, %219 : vector<8x32xf32>
    %243 = math.exp %242 : vector<8x32xf32>
    %244 = arith.mulf %239, %243 : vector<8x32xf32>
    %cst_100 = arith.constant 1.000000e+00 : f32
    %245 = vector.broadcast %cst_100 : f32 to vector<8x32xf32>
    %246 = arith.subf %245, %244 : vector<8x32xf32>
    %cst_101 = arith.constant 0.000000e+00 : f32
    %247 = vector.broadcast %cst_101 : f32 to vector<8x32xf32>
    %248 = arith.cmpf olt, %218, %247 : vector<8x32xf32>
    %cst_102 = arith.constant 0.000000e+00 : f32
    %249 = vector.broadcast %cst_102 : f32 to vector<8x32xf32>
    %250 = arith.subf %249, %246 : vector<8x32xf32>
    %251 = arith.select %248, %250, %246 : vector<8x32xi1>, vector<8x32xf32>
    %cst_103 = arith.constant 1.000000e+00 : f32
    %252 = vector.broadcast %cst_103 : f32 to vector<8x32xf32>
    %253 = arith.addf %252, %251 : vector<8x32xf32>
    %254 = arith.mulf %216, %253 : vector<8x32xf32>
    %255 = arith.addf %112, %254 : vector<8x32xf32>
    %c0_104 = arith.constant 0 : index
    %c0_105 = arith.constant 0 : index
    %c0_106 = arith.constant 0 : index
    %256 = vector.load %arg16[%c0_104, %c0_105, %c0_106] : memref<1x8x32xf32, #tpu.memory_space<vmem>>, vector<1x8x32xf32>
    %257 = vector.shape_cast %256 : vector<1x8x32xf32> to vector<8x32xf32>
    %258 = vector.shape_cast %255 : vector<8x32xf32> to vector<1x8x32xf32>
    tpu.vector_store %arg16[%c0_104, %c0_105, %c0_106], %258 {strides = array<i32>} : memref<1x8x32xf32, #tpu.memory_space<vmem>>, vector<1x8x32xf32>,
    return
  }
  func.func @transform_0(%arg0: i32) -> (i32, i32, i32) {
    %c0_i32 = arith.constant 0 : i32
    %c0_i32_0 = arith.constant 0 : i32
    %c0_i32_1 = arith.constant 0 : i32
    return %arg0, %c0_i32, %c0_i32_0 : i32, i32, i32
  }
  func.func @transform_1(%arg0: i32) -> (i32, i32) {
    %c0_i32 = arith.constant 0 : i32
    %c0_i32_0 = arith.constant 0 : i32
    %c0_i32_1 = arith.constant 0 : i32
    return %c0_i32, %c0_i32_0 : i32, i32
  }
  func.func @transform_2(%arg0: i32) -> (i32, i32) {
    %c0_i32 = arith.constant 0 : i32
    %c0_i32_0 = arith.constant 0 : i32
    %c0_i32_1 = arith.constant 0 : i32
    return %c0_i32, %c0_i32_0 : i32, i32
  }
  func.func @transform_3(%arg0: i32) -> (i32, i32) {
    %c0_i32 = arith.constant 0 : i32
    %c0_i32_0 = arith.constant 0 : i32
    %c0_i32_1 = arith.constant 0 : i32
    return %c0_i32, %c0_i32_0 : i32, i32
  }
  func.func @transform_4(%arg0: i32) -> (i32, i32) {
    %c0_i32 = arith.constant 0 : i32
    %c0_i32_0 = arith.constant 0 : i32
    %c0_i32_1 = arith.constant 0 : i32
    return %c0_i32, %c0_i32_0 : i32, i32
  }
  func.func @transform_5(%arg0: i32) -> (i32, i32) {
    %c0_i32 = arith.constant 0 : i32
    %c0_i32_0 = arith.constant 0 : i32
    %c0_i32_1 = arith.constant 0 : i32
    return %c0_i32, %c0_i32_0 : i32, i32
  }
  func.func @transform_6(%arg0: i32) -> (i32, i32) {
    %c0_i32 = arith.constant 0 : i32
    %c0_i32_0 = arith.constant 0 : i32
    %c0_i32_1 = arith.constant 0 : i32
    return %c0_i32, %c0_i32_0 : i32, i32
  }
  func.func @transform_7(%arg0: i32) -> (i32, i32) {
    %c0_i32 = arith.constant 0 : i32
    %c0_i32_0 = arith.constant 0 : i32
    %c0_i32_1 = arith.constant 0 : i32
    return %c0_i32, %c0_i32_0 : i32, i32
  }
  func.func @transform_8(%arg0: i32) -> (i32, i32) {
    %c0_i32 = arith.constant 0 : i32
    %c0_i32_0 = arith.constant 0 : i32
    %c0_i32_1 = arith.constant 0 : i32
    return %c0_i32, %c0_i32_0 : i32, i32
  }
  func.func @transform_9(%arg0: i32) -> (i32, i32) {
    %c0_i32 = arith.constant 0 : i32
    %c0_i32_0 = arith.constant 0 : i32
    %c0_i32_1 = arith.constant 0 : i32
    return %c0_i32, %c0_i32_0 : i32, i32
  }
  func.func @transform_10(%arg0: i32) -> (i32, i32) {
    %c0_i32 = arith.constant 0 : i32
    %c0_i32_0 = arith.constant 0 : i32
    %c0_i32_1 = arith.constant 0 : i32
    return %c0_i32, %c0_i32_0 : i32, i32
  }
  func.func @transform_11(%arg0: i32) -> (i32, i32) {
    %c0_i32 = arith.constant 0 : i32
    %c0_i32_0 = arith.constant 0 : i32
    %c0_i32_1 = arith.constant 0 : i32
    return %c0_i32, %c0_i32_0 : i32, i32
  }
  func.func @transform_12(%arg0: i32) -> (i32, i32) {
    %c0_i32 = arith.constant 0 : i32
    %c0_i32_0 = arith.constant 0 : i32
    %c0_i32_1 = arith.constant 0 : i32
    return %c0_i32, %c0_i32_0 : i32, i32
  }
  func.func @transform_13(%arg0: i32) -> (i32, i32) {
    %c0_i32 = arith.constant 0 : i32
    %c0_i32_0 = arith.constant 0 : i32
    %c0_i32_1 = arith.constant 0 : i32
    return %c0_i32, %c0_i32_0 : i32, i32
  }
  func.func @transform_14(%arg0: i32) -> (i32, i32) {
    %c0_i32 = arith.constant 0 : i32
    %c0_i32_0 = arith.constant 0 : i32
    %c0_i32_1 = arith.constant 0 : i32
    return %c0_i32, %c0_i32_0 : i32, i32
  }
  func.func @transform_15(%arg0: i32) -> (i32, i32, i32) {
    %c0_i32 = arith.constant 0 : i32
    %c0_i32_0 = arith.constant 0 : i32
    %c0_i32_1 = arith.constant 0 : i32
    return %arg0, %c0_i32, %c0_i32_0 : i32, i32, i32
  }
}

</mosaic_0001>

<llo_original>
// kernel: tpu_custom_call.1
$region0: #{tpu_custom_call.1}
  #allocation0 [shape = 'u32[]', space=smem, size = 0x4, offset = 0x4, fixed_abs, tag = 'smem constant byte address 0x4 - core index']
  #allocation1 [shape = 'u32[72,128]{1,0:T(1,128)}', space=vmem, size = 0x9000, scoped, tag = 'internal scratch']
  %s0 = inlined_call_operand.hbm [shape: f32[2,8,32], index: 0, kind: input, shape index: {}, may-alias: {0,15}]
  %s1 = inlined_call_operand.vmem [shape: f32[1,32], index: 1, kind: input, shape index: {}]
  %s2 = inlined_call_operand.vmem [shape: f32[1,32], index: 2, kind: input, shape index: {}]
  %s3 = inlined_call_operand.vmem [shape: f32[32,96], index: 3, kind: input, shape index: {}]
  %s4 = inlined_call_operand.vmem [shape: f32[1,96], index: 4, kind: input, shape index: {}]
  %s5 = inlined_call_operand.vmem [shape: f32[32,32], index: 5, kind: input, shape index: {}]
  %s6 = inlined_call_operand.vmem [shape: f32[1,32], index: 6, kind: input, shape index: {}]
  %s7 = inlined_call_operand.vmem [shape: f32[1,32], index: 7, kind: input, shape index: {}]
  %s8 = inlined_call_operand.vmem [shape: f32[1,32], index: 8, kind: input, shape index: {}]
  %s9 = inlined_call_operand.vmem [shape: f32[1,32], index: 9, kind: input, shape index: {}]
  %s10 = inlined_call_operand.vmem [shape: f32[1,32], index: 10, kind: input, shape index: {}]
  %s11 = inlined_call_operand.vmem [shape: f32[32,128], index: 11, kind: input, shape index: {}]
  %s12 = inlined_call_operand.vmem [shape: f32[1,128], index: 12, kind: input, shape index: {}]
  %s13 = inlined_call_operand.vmem [shape: f32[128,32], index: 13, kind: input, shape index: {}]
  %s14 = inlined_call_operand.vmem [shape: f32[1,32], index: 14, kind: input, shape index: {}]
  %s15 = inlined_call_operand.hbm [shape: f32[2,8,32], index: 15, kind: output, shape index: {}, may-alias: {0,15}]
  %s16 = sld [smem:[#allocation0]]
  $region97: #{tpu_custom_call.1} parent=0
    _
  %s18 = ssub.s32 1, %s16
  %s19 = scalar_select 0, %s18, %s16
  $region1: #{tpu_custom_call.1} parent=0
    #allocation2 [shape = 'u8[8192]{0}', space=vmem, size = 0x2000, scoped, tag = 'input window, operand 0']
    #allocation3 [shape = 's32[2]{0}', space=sflag, size = 0x8, scoped, tag = 'scoped memory for tpu_custom_call.1']
    #allocation4 [shape = 's32[2]{0}', space=sflag, size = 0x8, scoped, tag = 'scoped memory for tpu_custom_call.1']
    #allocation5 [shape = 'u8[8192]{0}', space=vmem, size = 0x2000, scoped, tag = 'output window, operand 0']
    %20 = vsyncpa [#allocation3], 0
    %s21 = scalar_lea.sflag [#allocation3], 1
    %22 = vsyncpa %s21, 0
    %23 = vsyncpa [#allocation4], 0
    %s24 = scalar_lea.sflag [#allocation4], 1
    %25 = vsyncpa %s24, 0
    loop: start=0, step=1, limit=4
    $region2: #{tpu_custom_call.1} parent=1 // loop_pre_header
      _
    $region3: #{tpu_custom_call.1} parent=1 // loop_header
      %s27 = sphi 0, %s31
      %p28 = scmp.ge.s32.totalorder %s27, 4
      %s37 = sphi 0, %s39
      %s40 = sphi 0, %s37
      %s41 = sphi 0, %s40
      %s57 = sphi 0, %s41
      %s61 = sphi 0, %s61
      %s63 = sphi 0, %s61
      %s64 = sphi 0, %s63
      %s78 = sphi 0, %s64
      %s82 = sphi 0, %s82
      %s84 = sphi 0, %s82
      %s85 = sphi 0, %s84
      %s99 = sphi 0, %s85
      %s103 = sphi 0, %s103
      %s105 = sphi 0, %s103
      %s106 = sphi 0, %s105
      %s120 = sphi 0, %s106
      %s124 = sphi 0, %s124
      %s126 = sphi 0, %s124
      %s127 = sphi 0, %s126
      %s141 = sphi 0, %s127
      %s145 = sphi 0, %s145
      %s147 = sphi 0, %s145
      %s148 = sphi 0, %s147
      %s162 = sphi 0, %s148
      %s166 = sphi 0, %s166
      %s168 = sphi 0, %s166
      %s169 = sphi 0, %s168
      %s183 = sphi 0, %s169
      %s187 = sphi 0, %s187
      %s189 = sphi 0, %s187
      %s190 = sphi 0, %s189
      %s204 = sphi 0, %s190
      %s208 = sphi 0, %s208
      %s210 = sphi 0, %s208
      %s211 = sphi 0, %s210
      %s225 = sphi 0, %s211
      %s229 = sphi 0, %s229
      %s231 = sphi 0, %s229
      %s232 = sphi 0, %s231
      %s246 = sphi 0, %s232
      %s250 = sphi 0, %s250
      %s252 = sphi 0, %s250
      %s253 = sphi 0, %s252
      %s267 = sphi 0, %s253
      %s271 = sphi 0, %s271
      %s273 = sphi 0, %s271
      %s274 = sphi 0, %s273
      %s288 = sphi 0, %s274
      %s292 = sphi 0, %s292
      %s294 = sphi 0, %s292
      %s295 = sphi 0, %s294
      %s309 = sphi 0, %s295
      %s313 = sphi 0, %s313
      %s315 = sphi 0, %s313
      %s316 = sphi 0, %s315
      %s330 = sphi 0, %s316
      %s334 = sphi 0, %s334
      %s336 = sphi 0, %s334
      %s337 = sphi 0, %s336
      %s351 = sphi 0, %s337
      %s357 = sphi 0, %s359
      %s360 = sphi 0, %s357
      %s361 = sphi 0, %s360
      %s377 = sphi 0, %s361
    $region4: #{tpu_custom_call.1} parent=1 // loop_header_branch
      %30 = sbr.rel (%p28) target = $region8
    $region5: #{tpu_custom_call.1} parent=1 // loop_body
      %s32 = ssub.s32 %s27, 1
      %s33 = ssub.s32 %s27, 2
      %s34 = sadd.s32 %s27, 1
      %s35 = ssub.s32 %s27, %s34
      %p36 = scmp.eq.s32.totalorder %s35, 0
      %s38 = sadd.s32 %s37, 1
      %s39 = scalar_select %p36, %s37, %s38
      %p42 = pneg %p36
      %p43 = scmp.eq.s32.totalorder %s27, 1
      %p44 = por %p42, %p43
      %p45 = scmp.ne.s32.totalorder %s37, %s40
      %p46 = scmp.eq.s32.totalorder %s27, 0
      %p47 = por %p45, %p46
      %p48 = scmp.ne.s32.totalorder %s37, %s40
      %p49 = scmp.eq.s32.totalorder %s32, 1
      %p50 = por %p48, %p49
      %p51 = scmp.ne.s32.totalorder %s40, %s41
      %p52 = scmp.eq.s32.totalorder %s32, 0
      %p53 = por %p51, %p52
      %p54 = scmp.ne.s32.totalorder %s40, %s41
      %p55 = scmp.eq.s32.totalorder %s33, 1
      %p56 = por %p54, %p55
      %p58 = scmp.ne.s32.totalorder %s41, %s57
      %p59 = scmp.eq.s32.totalorder %s33, 0
      %p60 = por %p58, %p59
      %s62 = sadd.s32 %s61, 1
      %p65 = scmp.eq.s32.totalorder %s27, 1
      %p66 = scmp.ne.s32.totalorder %s61, %s63
      %p67 = scmp.eq.s32.totalorder %s27, 0
      %p68 = por %p66, %p67
      %p69 = scmp.ne.s32.totalorder %s61, %s63
      %p70 = scmp.eq.s32.totalorder %s32, 1
      %p71 = por %p69, %p70
      %p72 = scmp.ne.s32.totalorder %s63, %s64
      %p73 = scmp.eq.s32.totalorder %s32, 0
      %p74 = por %p72, %p73
      %p75 = scmp.ne.s32.totalorder %s63, %s64
      %p76 = scmp.eq.s32.totalorder %s33, 1
      %p77 = por %p75, %p76
      %p79 = scmp.ne.s32.totalorder %s64, %s78
      %p80 = scmp.eq.s32.totalorder %s33, 0
      %p81 = por %p79, %p80
      %s83 = sadd.s32 %s82, 1
      %p86 = scmp.eq.s32.totalorder %s27, 1
      %p87 = scmp.ne.s32.totalorder %s82, %s84
      %p88 = scmp.eq.s32.totalorder %s27, 0
      %p89 = por %p87, %p88
      %p90 = scmp.ne.s32.totalorder %s82, %s84
      %p91 = scmp.eq.s32.totalorder %s32, 1
      %p92 = por %p90, %p91
      %p93 = scmp.ne.s32.totalorder %s84, %s85
      %p94 = scmp.eq.s32.totalorder %s32, 0
      %p95 = por %p93, %p94
      %p96 = scmp.ne.s32.totalorder %s84, %s85
      %p97 = scmp.eq.s32.totalorder %s33, 1
      %p98 = por %p96, %p97
      %p100 = scmp.ne.s32.totalorder %s85, %s99
      %p101 = scmp.eq.s32.totalorder %s33, 0
      %p102 = por %p100, %p101
      %s104 = sadd.s32 %s103, 1
      %p107 = scmp.eq.s32.totalorder %s27, 1
      %p108 = scmp.ne.s32.totalorder %s103, %s105
      %p109 = scmp.eq.s32.totalorder %s27, 0
      %p110 = por %p108, %p109
      %p111 = scmp.ne.s32.totalorder %s103, %s105
      %p112 = scmp.eq.s32.totalorder %s32, 1
      %p113 = por %p111, %p112
      %p114 = scmp.ne.s32.totalorder %s105, %s106
      %p115 = scmp.eq.s32.totalorder %s32, 0
      %p116 = por %p114, %p115
      %p117 = scmp.ne.s32.totalorder %s105, %s106
      %p118 = scmp.eq.s32.totalorder %s33, 1
      %p119 = por %p117, %p118
      %p121 = scmp.ne.s32.totalorder %s106, %s120
      %p122 = scmp.eq.s32.totalorder %s33, 0
      %p123 = por %p121, %p122
      %s125 = sadd.s32 %s124, 1
      %p128 = scmp.eq.s32.totalorder %s27, 1
      %p129 = scmp.ne.s32.totalorder %s124, %s126
      %p130 = scmp.eq.s32.totalorder %s27, 0
      %p131 = por %p129, %p130
      %p132 = scmp.ne.s32.totalorder %s124, %s126
      %p133 = scmp.eq.s32.totalorder %s32, 1
      %p134 = por %p132, %p133
      %p135 = scmp.ne.s32.totalorder %s126, %s127
      %p136 = scmp.eq.s32.totalorder %s32, 0
      %p137 = por %p135, %p136
      %p138 = scmp.ne.s32.totalorder %s126, %s127
      %p139 = scmp.eq.s32.totalorder %s33, 1
      %p140 = por %p138, %p139
      %p142 = scmp.ne.s32.totalorder %s127, %s141
      %p143 = scmp.eq.s32.totalorder %s33, 0
      %p144 = por %p142, %p143
      %s146 = sadd.s32 %s145, 1
      %p149 = scmp.eq.s32.totalorder %s27, 1
      %p150 = scmp.ne.s32.totalorder %s145, %s147
      %p151 = scmp.eq.s32.totalorder %s27, 0
      %p152 = por %p150, %p151
      %p153 = scmp.ne.s32.totalorder %s145, %s147
      %p154 = scmp.eq.s32.totalorder %s32, 1
      %p155 = por %p153, %p154
      %p156 = scmp.ne.s32.totalorder %s147, %s148
      %p157 = scmp.eq.s32.totalorder %s32, 0
      %p158 = por %p156, %p157
      %p159 = scmp.ne.s32.totalorder %s147, %s148
      %p160 = scmp.eq.s32.totalorder %s33, 1
      %p161 = por %p159, %p160
      %p163 = scmp.ne.s32.totalorder %s148, %s162
      %p164 = scmp.eq.s32.totalorder %s33, 0
      %p165 = por %p163, %p164
      %s167 = sadd.s32 %s166, 1
      %p170 = scmp.eq.s32.totalorder %s27, 1
      %p171 = scmp.ne.s32.totalorder %s166, %s168
      %p172 = scmp.eq.s32.totalorder %s27, 0
      %p173 = por %p171, %p172
      %p174 = scmp.ne.s32.totalorder %s166, %s168
      %p175 = scmp.eq.s32.totalorder %s32, 1
      %p176 = por %p174, %p175
      %p177 = scmp.ne.s32.totalorder %s168, %s169
      %p178 = scmp.eq.s32.totalorder %s32, 0
      %p179 = por %p177, %p178
      %p180 = scmp.ne.s32.totalorder %s168, %s169
      %p181 = scmp.eq.s32.totalorder %s33, 1
      %p182 = por %p180, %p181
      %p184 = scmp.ne.s32.totalorder %s169, %s183
      %p185 = scmp.eq.s32.totalorder %s33, 0
      %p186 = por %p184, %p185
      %s188 = sadd.s32 %s187, 1
      %p191 = scmp.eq.s32.totalorder %s27, 1
      %p192 = scmp.ne.s32.totalorder %s187, %s189
      %p193 = scmp.eq.s32.totalorder %s27, 0
      %p194 = por %p192, %p193
      %p195 = scmp.ne.s32.totalorder %s187, %s189
      %p196 = scmp.eq.s32.totalorder %s32, 1
      %p197 = por %p195, %p196
      %p198 = scmp.ne.s32.totalorder %s189, %s190
      %p199 = scmp.eq.s32.totalorder %s32, 0
      %p200 = por %p198, %p199
      %p201 = scmp.ne.s32.totalorder %s189, %s190
      %p202 = scmp.eq.s32.totalorder %s33, 1
      %p203 = por %p201, %p202
      %p205 = scmp.ne.s32.totalorder %s190, %s204
      %p206 = scmp.eq.s32.totalorder %s33, 0
      %p207 = por %p205, %p206
      %s209 = sadd.s32 %s208, 1
      %p212 = scmp.eq.s32.totalorder %s27, 1
      %p213 = scmp.ne.s32.totalorder %s208, %s210
      %p214 = scmp.eq.s32.totalorder %s27, 0
      %p215 = por %p213, %p214
      %p216 = scmp.ne.s32.totalorder %s208, %s210
      %p217 = scmp.eq.s32.totalorder %s32, 1
      %p218 = por %p216, %p217
      %p219 = scmp.ne.s32.totalorder %s210, %s211
      %p220 = scmp.eq.s32.totalorder %s32, 0
      %p221 = por %p219, %p220
      %p222 = scmp.ne.s32.totalorder %s210, %s211
      %p223 = scmp.eq.s32.totalorder %s33, 1
      %p224 = por %p222, %p223
      %p226 = scmp.ne.s32.totalorder %s211, %s225
      %p227 = scmp.eq.s32.totalorder %s33, 0
      %p228 = por %p226, %p227
      %s230 = sadd.s32 %s229, 1
      %p233 = scmp.eq.s32.totalorder %s27, 1
      %p234 = scmp.ne.s32.totalorder %s229, %s231
      %p235 = scmp.eq.s32.totalorder %s27, 0
      %p236 = por %p234, %p235
      %p237 = scmp.ne.s32.totalorder %s229, %s231
      %p238 = scmp.eq.s32.totalorder %s32, 1
      %p239 = por %p237, %p238
      %p240 = scmp.ne.s32.totalorder %s231, %s232
      %p241 = scmp.eq.s32.totalorder %s32, 0
      %p242 = por %p240, %p241
      %p243 = scmp.ne.s32.totalorder %s231, %s232
      %p244 = scmp.eq.s32.totalorder %s33, 1
      %p245 = por %p243, %p244
      %p247 = scmp.ne.s32.totalorder %s232, %s246
      %p248 = scmp.eq.s32.totalorder %s33, 0
      %p249 = por %p247, %p248
      %s251 = sadd.s32 %s250, 1
      %p254 = scmp.eq.s32.totalorder %s27, 1
      %p255 = scmp.ne.s32.totalorder %s250, %s252
      %p256 = scmp.eq.s32.totalorder %s27, 0
      %p257 = por %p255, %p256
      %p258 = scmp.ne.s32.totalorder %s250, %s252
      %p259 = scmp.eq.s32.totalorder %s32, 1
      %p260 = por %p258, %p259
      %p261 = scmp.ne.s32.totalorder %s252, %s253
      %p262 = scmp.eq.s32.totalorder %s32, 0
      %p263 = por %p261, %p262
      %p264 = scmp.ne.s32.totalorder %s252, %s253
      %p265 = scmp.eq.s32.totalorder %s33, 1
      %p266 = por %p264, %p265
      %p268 = scmp.ne.s32.totalorder %s253, %s267
      %p269 = scmp.eq.s32.totalorder %s33, 0
      %p270 = por %p268, %p269
      %s272 = sadd.s32 %s271, 1
      %p275 = scmp.eq.s32.totalorder %s27, 1
      %p276 = scmp.ne.s32.totalorder %s271, %s273
      %p277 = scmp.eq.s32.totalorder %s27, 0
      %p278 = por %p276, %p277
      %p279 = scmp.ne.s32.totalorder %s271, %s273
      %p280 = scmp.eq.s32.totalorder %s32, 1
      %p281 = por %p279, %p280
      %p282 = scmp.ne.s32.totalorder %s273, %s274
      %p283 = scmp.eq.s32.totalorder %s32, 0
      %p284 = por %p282, %p283
      %p285 = scmp.ne.s32.totalorder %s273, %s274
      %p286 = scmp.eq.s32.totalorder %s33, 1
      %p287 = por %p285, %p286
      %p289 = scmp.ne.s32.totalorder %s274, %s288
      %p290 = scmp.eq.s32.totalorder %s33, 0
      %p291 = por %p289, %p290
      %s293 = sadd.s32 %s292, 1
      %p296 = scmp.eq.s32.totalorder %s27, 1
      %p297 = scmp.ne.s32.totalorder %s292, %s294
      %p298 = scmp.eq.s32.totalorder %s27, 0
      %p299 = por %p297, %p298
      %p300 = scmp.ne.s32.totalorder %s292, %s294
      %p301 = scmp.eq.s32.totalorder %s32, 1
      %p302 = por %p300, %p301
      %p303 = scmp.ne.s32.totalorder %s294, %s295
      %p304 = scmp.eq.s32.totalorder %s32, 0
      %p305 = por %p303, %p304
      %p306 = scmp.ne.s32.totalorder %s294, %s295
      %p307 = scmp.eq.s32.totalorder %s33, 1
      %p308 = por %p306, %p307
      %p310 = scmp.ne.s32.totalorder %s295, %s309
      %p311 = scmp.eq.s32.totalorder %s33, 0
      %p312 = por %p310, %p311
      %s314 = sadd.s32 %s313, 1
      %p317 = scmp.eq.s32.totalorder %s27, 1
      %p318 = scmp.ne.s32.totalorder %s313, %s315
      %p319 = scmp.eq.s32.totalorder %s27, 0
      %p320 = por %p318, %p319
      %p321 = scmp.ne.s32.totalorder %s313, %s315
      %p322 = scmp.eq.s32.totalorder %s32, 1
      %p323 = por %p321, %p322
      %p324 = scmp.ne.s32.totalorder %s315, %s316
      %p325 = scmp.eq.s32.totalorder %s32, 0
      %p326 = por %p324, %p325
      %p327 = scmp.ne.s32.totalorder %s315, %s316
      %p328 = scmp.eq.s32.totalorder %s33, 1
      %p329 = por %p327, %p328
      %p331 = scmp.ne.s32.totalorder %s316, %s330
      %p332 = scmp.eq.s32.totalorder %s33, 0
      %p333 = por %p331, %p332
      %s335 = sadd.s32 %s334, 1
      %p338 = scmp.eq.s32.totalorder %s27, 1
      %p339 = scmp.ne.s32.totalorder %s334, %s336
      %p340 = scmp.eq.s32.totalorder %s27, 0
      %p341 = por %p339, %p340
      %p342 = scmp.ne.s32.totalorder %s334, %s336
      %p343 = scmp.eq.s32.totalorder %s32, 1
      %p344 = por %p342, %p343
      %p345 = scmp.ne.s32.totalorder %s336, %s337
      %p346 = scmp.eq.s32.totalorder %s32, 0
      %p347 = por %p345, %p346
      %p348 = scmp.ne.s32.totalorder %s336, %s337
      %p349 = scmp.eq.s32.totalorder %s33, 1
      %p350 = por %p348, %p349
      %p352 = scmp.ne.s32.totalorder %s337, %s351
      %p353 = scmp.eq.s32.totalorder %s33, 0
      %p354 = por %p352, %p353
      %s355 = ssub.s32 %s27, %s34
      %p356 = scmp.eq.s32.totalorder %s355, 0
      %s358 = sadd.s32 %s357, 1
      %s359 = scalar_select %p356, %s357, %s358
      %p362 = pneg %p356
      %p363 = scmp.eq.s32.totalorder %s27, 1
      %p364 = por %p362, %p363
      %p365 = scmp.ne.s32.totalorder %s357, %s360
      %p366 = scmp.eq.s32.totalorder %s27, 0
      %p367 = por %p365, %p366
      %p368 = scmp.ne.s32.totalorder %s357, %s360
      %p369 = scmp.eq.s32.totalorder %s32, 1
      %p370 = por %p368, %p369
      %p371 = scmp.ne.s32.totalorder %s360, %s361
      %p372 = scmp.eq.s32.totalorder %s32, 0
      %p373 = por %p371, %p372
      %p374 = scmp.ne.s32.totalorder %s360, %s361
      %p375 = scmp.eq.s32.totalorder %s33, 1
      %p376 = por %p374, %p375
      %p378 = scmp.ne.s32.totalorder %s361, %s377
      %p379 = scmp.eq.s32.totalorder %s33, 0
      %p380 = por %p378, %p379
      %p381 = scmp.le.s32.totalorder 1, %s27
      %p382 = scmp.lt.s32.totalorder %s27, 3
      %p383 = pnand %p381, %p382
      %p384 = pneg %p383
      // Predicated region
      $region9: #{tpu_custom_call.1} parent=5 // pred_check
        _
      $region10: #{tpu_custom_call.1} parent=5 // pred_check_branch
        %386 = sbr.rel (%p383) target = $region12
      $region11: #{tpu_custom_call.1} parent=5 // pred_region
        %s387 = ssub.s32 %s27, 1
        // Predicated region
        $region13: #{tpu_custom_call.1} parent=11 // pred_check
          %p388 = pneg %p74
        $region14: #{tpu_custom_call.1} parent=11 // pred_check_branch
          %390 = sbr.rel (%p388) target = $region16
        $region15: #{tpu_custom_call.1} parent=11 // pred_region
          _
        $region16: #{tpu_custom_call.1} parent=11 // pred_fallthru
          _
        // Predicated region
        $region17: #{tpu_custom_call.1} parent=11 // pred_check
          %p391 = pneg %p95
        $region18: #{tpu_custom_call.1} parent=11 // pred_check_branch
          %393 = sbr.rel (%p391) target = $region20
        $region19: #{tpu_custom_call.1} parent=11 // pred_region
          _
        $region20: #{tpu_custom_call.1} parent=11 // pred_fallthru
          _
        // Predicated region
        $region21: #{tpu_custom_call.1} parent=11 // pred_check
          %p394 = pneg %p116
        $region22: #{tpu_custom_call.1} parent=11 // pred_check_branch
          %396 = sbr.rel (%p394) target = $region24
        $region23: #{tpu_custom_call.1} parent=11 // pred_region
          _
        $region24: #{tpu_custom_call.1} parent=11 // pred_fallthru
          _
        // Predicated region
        $region25: #{tpu_custom_call.1} parent=11 // pred_check
          %p397 = pneg %p137
        $region26: #{tpu_custom_call.1} parent=11 // pred_check_branch
          %399 = sbr.rel (%p397) target = $region28
        $region27: #{tpu_custom_call.1} parent=11 // pred_region
          _
        $region28: #{tpu_custom_call.1} parent=11 // pred_fallthru
          _
        // Predicated region
        $region29: #{tpu_custom_call.1} parent=11 // pred_check
          %p400 = pneg %p158
        $region30: #{tpu_custom_call.1} parent=11 // pred_check_branch
          %402 = sbr.rel (%p400) target = $region32
        $region31: #{tpu_custom_call.1} parent=11 // pred_region
          _
        $region32: #{tpu_custom_call.1} parent=11 // pred_fallthru
          _
        // Predicated region
        $region33: #{tpu_custom_call.1} parent=11 // pred_check
          %p403 = pneg %p179
        $region34: #{tpu_custom_call.1} parent=11 // pred_check_branch
          %405 = sbr.rel (%p403) target = $region36
        $region35: #{tpu_custom_call.1} parent=11 // pred_region
          _
        $region36: #{tpu_custom_call.1} parent=11 // pred_fallthru
          _
        // Predicated region
        $region37: #{tpu_custom_call.1} parent=11 // pred_check
          %p406 = pneg %p200
        $region38: #{tpu_custom_call.1} parent=11 // pred_check_branch
          %408 = sbr.rel (%p406) target = $region40
        $region39: #{tpu_custom_call.1} parent=11 // pred_region
          _
        $region40: #{tpu_custom_call.1} parent=11 // pred_fallthru
          _
        // Predicated region
        $region41: #{tpu_custom_call.1} parent=11 // pred_check
          %p409 = pneg %p221
        $region42: #{tpu_custom_call.1} parent=11 // pred_check_branch
          %411 = sbr.rel (%p409) target = $region44
        $region43: #{tpu_custom_call.1} parent=11 // pred_region
          _
        $region44: #{tpu_custom_call.1} parent=11 // pred_fallthru
          _
        // Predicated region
        $region45: #{tpu_custom_call.1} parent=11 // pred_check
          %p412 = pneg %p242
        $region46: #{tpu_custom_call.1} parent=11 // pred_check_branch
          %414 = sbr.rel (%p412) target = $region48
        $region47: #{tpu_custom_call.1} parent=11 // pred_region
          _
        $region48: #{tpu_custom_call.1} parent=11 // pred_fallthru
          _
        // Predicated region
        $region49: #{tpu_custom_call.1} parent=11 // pred_check
          %p415 = pneg %p263
        $region50: #{tpu_custom_call.1} parent=11 // pred_check_branch
          %417 = sbr.rel (%p415) target = $region52
        $region51: #{tpu_custom_call.1} parent=11 // pred_region
          _
        $region52: #{tpu_custom_call.1} parent=11 // pred_fallthru
          _
        // Predicated region
        $region53: #{tpu_custom_call.1} parent=11 // pred_check
          %p418 = pneg %p284
        $region54: #{tpu_custom_call.1} parent=11 // pred_check_branch
          %420 = sbr.rel (%p418) target = $region56
        $region55: #{tpu_custom_call.1} parent=11 // pred_region
          _
        $region56: #{tpu_custom_call.1} parent=11 // pred_fallthru
          _
        // Predicated region
        $region57: #{tpu_custom_call.1} parent=11 // pred_check
          %p421 = pneg %p305
        $region58: #{tpu_custom_call.1} parent=11 // pred_check_branch
          %423 = sbr.rel (%p421) target = $region60
        $region59: #{tpu_custom_call.1} parent=11 // pred_region
          _
        $region60: #{tpu_custom_call.1} parent=11 // pred_fallthru
          _
        // Predicated region
        $region61: #{tpu_custom_call.1} parent=11 // pred_check
          %p424 = pneg %p326
        $region62: #{tpu_custom_call.1} parent=11 // pred_check_branch
          %426 = sbr.rel (%p424) target = $region64
        $region63: #{tpu_custom_call.1} parent=11 // pred_region
          _
        $region64: #{tpu_custom_call.1} parent=11 // pred_fallthru
          _
        // Predicated region
        $region65: #{tpu_custom_call.1} parent=11 // pred_check
          %p427 = pneg %p347
        $region66: #{tpu_custom_call.1} parent=11 // pred_check_branch
          %429 = sbr.rel (%p427) target = $region68
        $region67: #{tpu_custom_call.1} parent=11 // pred_region
          _
        $region68: #{tpu_custom_call.1} parent=11 // pred_fallthru
          _
      $region12: #{tpu_custom_call.1} parent=5 // pred_fallthru
        _
      %p430 = scmp.lt.s32.totalorder %s27, 2
      // Predicated region
      $region69: #{tpu_custom_call.1} parent=5 // pred_check
        %p431 = pneg %p430
      $region70: #{tpu_custom_call.1} parent=5 // pred_check_branch
        %433 = sbr.rel (%p431) target = $region72
      $region71: #{tpu_custom_call.1} parent=5 // pred_region
        // Predicated region
        $region73: #{tpu_custom_call.1} parent=71 // pred_check
          %p434 = pneg %p47
        $region74: #{tpu_custom_call.1} parent=71 // pred_check_branch
          %436 = sbr.rel (%p434) target = $region76
        $region75: #{tpu_custom_call.1} parent=71 // pred_region
          %s437 = sand.u32 %s37, 1
          %s438 = scalar_lea.sflag [#allocation3], %s437
          %s439 = sand.u32 %s37, 1
          %s440 = smul.addr %s439, 8
          %s441 = scalar_lea.vmem [#allocation2], %s440
          %443 = vsyncadd %s438, 0
          %s444 = smul.addr %s27, 8
          %s445 = scalar_lea.hbm %s0, %s444
          %s447 = sshll.u32 %s445, 4
          %s448 = int_to_ptr.hbm [resolvable:$true] %s447
          %s449 = sshll.u32 %s441, 4
          %s450 = int_to_ptr.vmem [resolvable:$true] %s449
          %452 = dma.hbm_to_vmem [thread:$0]  %s448, 128, %s450, %s438
        $region76: #{tpu_custom_call.1} parent=71 // pred_fallthru
          _
      $region72: #{tpu_custom_call.1} parent=5 // pred_fallthru
        _
      %p453 = scmp.le.s32.totalorder 1, %s27
      %p454 = scmp.lt.s32.totalorder %s27, 3
      %p455 = pnand %p453, %p454
      %p456 = pneg %p455
      // Predicated region
      $region77: #{tpu_custom_call.1} parent=5 // pred_check
        _
      $region78: #{tpu_custom_call.1} parent=5 // pred_check_branch
        %458 = sbr.rel (%p455) target = $region80
      $region79: #{tpu_custom_call.1} parent=5 // pred_region
        %s459 = ssub.s32 %s27, 1
        %s460 = sand.u32 %s40, 1
        %s461 = scalar_lea.sflag [#allocation3], %s460
        %s462 = sand.u32 %s40, 1
        %s463 = smul.addr %s462, 8
        %s464 = scalar_lea.vmem [#allocation2], %s463
        // Predicated region
        $region81: #{tpu_custom_call.1} parent=79 // pred_check
          %p465 = pneg %p53
        $region82: #{tpu_custom_call.1} parent=79 // pred_check_branch
          %467 = sbr.rel (%p465) target = $region84
        $region83: #{tpu_custom_call.1} parent=79 // pred_region
          %469 = dma.done %s461, 128
        $region84: #{tpu_custom_call.1} parent=79 // pred_fallthru
          _
        %s470 = sand.u32 %s40, 1
        %s471 = scalar_lea.sflag [#allocation3], %s470
        %s472 = sand.u32 %s40, 1
        %s473 = smul.addr %s472, 8
        %s474 = scalar_lea.vmem [#allocation2], %s473
        %p475 = pneg %p53
        %p476 = pneg %p50
        %p477 = pneg %p74
        %p478 = pneg %p71
        %p479 = pneg %p95
        %p480 = pneg %p92
        %p481 = pneg %p116
        %p482 = pneg %p113
        %p483 = pneg %p137
        %p484 = pneg %p134
        %p485 = pneg %p158
        %p486 = pneg %p155
        %p487 = pneg %p179
        %p488 = pneg %p176
        %p489 = pneg %p200
        %p490 = pneg %p197
        %p491 = pneg %p221
        %p492 = pneg %p218
        %p493 = pneg %p242
        %p494 = pneg %p239
        %p495 = pneg %p263
        %p496 = pneg %p260
        %p497 = pneg %p284
        %p498 = pneg %p281
        %p499 = pneg %p305
        %p500 = pneg %p302
        %p501 = pneg %p326
        %p502 = pneg %p323
        %p503 = pneg %p347
        %p504 = pneg %p344
        %p505 = pneg %p373
        %p506 = pneg %p370
        %s507 = sand.u32 %s360, 1
        %s508 = scalar_lea.sflag [#allocation4], %s507
        %s509 = sand.u32 %s360, 1
        %s510 = smul.addr %s509, 8
        %s511 = scalar_lea.vmem [#allocation5], %s510
        %v512 = vld [vmem:[%s464] sm:$0xff]
        %v513 = vld [vmem:[%s1] sm:$0x1]
        %v514 = vld [vmem:[%s2] sm:$0x1]
        %vm515 = vcmask 261120
        %v516 = vsel %vm515, %v512, 0.0
        %517 = vadd.xlane.f32.xlu0 %v516
        %v518 = vpop.xlane.xlu0 %517
        %v519 = vrcp.pop 32.0
        %v520 = vmul.f32 32.0, %v519
        %v521 = vsub.f32 1.0, %v520
        %v522 = vmul.f32 %v519, %v521
        %v523 = vadd.f32 %v519, %v522
        %vm524 = vweird.f32 %v519
        %v525 = vsel %vm524, %v519, %v523
        %v526 = vmul.f32 %v518, %v525
        %v527 = vmul.f32 %v512, %v512
        %v528 = vsel %vm515, %v527, 0.0
        %529 = vadd.xlane.f32.xlu0 %v528
        %v530 = vpop.xlane.xlu0 %529
        %v531 = vmul.f32 %v530, %v525
        %v532 = vmul.f32 %v526, %v526
        %v533 = vsub.f32 %v531, %v532
        %v534 = vmax.f32 %v533, 0.0
        %v535 = vsub.f32 %v512, %v526
        %v536 = vadd.f32 %v534, 1e-05
        %v537 = vrsqrt.pop %v536
        %v538 = vmul.f32 %v537, %v536
        %v539 = vmul.f32 %v538, %v537
        %v540 = vmul.f32 0.5, %v539
        %v541 = vsub.f32 1.5, %v540
        %v542 = vmul.f32 %v537, %v541
        %vm543 = vweird.f32 %v536
        %vm544 = vweird.f32 %v537
        %vm545 = vmor %vm543, %vm544
        %v546 = vsel %vm545, %v537, %v542
        %v547 = vmul.f32 %v535, %v546
        %v549 = vperm.slane %v513, 0
        %v551 = vmul.f32 %v547, %v549
        %v553 = vperm.slane %v514, 0
        %v555 = vadd.f32 %v551, %v553
        %v556 = vld [vmem:[%s3] sm:$0xff]
        %v557 = vld [vmem:[%s3 + $0x8] sm:$0xff]
        %v558 = vld [vmem:[%s3 + $0x10] sm:$0xff]
        %v559 = vld [vmem:[%s3 + $0x18] sm:$0xff]
        %v560 = vld [vmem:[%s4] sm:$0x1]
        %v562 = vperm.slane %v560, 0
        %v565 = vsel %vm515, %v555, 0
        %567 = vmatpush.msra.mxu0 0.0
        %568 = vmatpush.msra.mxu0 0.0
        %569 = vmatpush.msra.mxu0 0.0
        %570 = vmatpush.msra.mxu0 0.0
        %571 = vmatpush.msra.mxu0 0.0
        %572 = vmatpush.msra.mxu0 0.0
        %573 = vmatpush.msra.mxu0 0.0
        %574 = vmatpush.msra.mxu0 0.0
        %575 = vmatpush.msra.mxu0 0.0
        %576 = vmatpush.msra.mxu0 0.0
        %577 = vmatpush.msra.mxu0 0.0
        %578 = vmatpush.msra.mxu0 0.0
        %579 = vmatpush.msra.mxu0 %v559
        %580 = vmatpush.msra.mxu0 %v558
        %581 = vmatpush.msra.mxu0 %v557
        %582 = vmatpush.msra.mxu0 %v556
        %583 = vmatmul.f32.gmra.mxu0 %v565
        %v584 = vpop.f32.mrf.mxu0
        %v585 = vadd.f32 %v562, %v584
        %586 = vdwg.mxu0
        %588 = vrot.lane.b32.xlu0 %v585, 96
        %v589 = vpop.permute.xlu0 %588
        %vm590 = vcmask 64512
        %v591 = vsel %vm590, %v585, 0
        %v593 = vsel %vm590, %v589, 0
        %595 = vmatpush.xpose.msra.mxu0 0.0
        %596 = vmatpush.xpose.msra.mxu0 0.0
        %597 = vmatpush.xpose.msra.mxu0 0.0
        %598 = vmatpush.xpose.msra.mxu0 0.0
        %599 = vmatpush.xpose.msra.mxu0 0.0
        %600 = vmatpush.xpose.msra.mxu0 0.0
        %601 = vmatpush.xpose.msra.mxu0 0.0
        %602 = vmatpush.xpose.msra.mxu0 0.0
        %603 = vmatpush.xpose.msra.mxu0 0.0
        %604 = vmatpush.xpose.msra.mxu0 0.0
        %605 = vmatpush.xpose.msra.mxu0 0.0
        %606 = vmatpush.xpose.msra.mxu0 0.0
        %607 = vmatpush.xpose.msra.mxu0 0.0
        %608 = vmatpush.xpose.msra.mxu0 0.0
        %609 = vmatpush.xpose.msra.mxu0 0.0
        %610 = vmatpush.xpose.msra.mxu0 %v593
        %611 = vmatmul.f32.gmra.mxu0 %v591
        %v612 = vpop.f32.mrf.mxu0
        %v613 = vadd.f32 0.0, %v612
        %614 = vdwg.mxu0
        %v615 = vsel %vm590, %v613, -inf
        %616 = vmax.xlane.f32.xlu0 %v615
        %v617 = vpop.xlane.xlu0 %616
        %v618 = vsub.f32 %v613, %v617
        %v619 = vmul.f32 %v618, 1.442695
        %v620 = vpow.pop %v619
        %v621 = vsel %vm590, %v620, 0.0
        %622 = vadd.xlane.f32.xlu0 %v621
        %v623 = vpop.xlane.xlu0 %622
        %v624 = vrcp.pop %v623
        %v625 = vmul.f32 %v623, %v624
        %v626 = vsub.f32 1.0, %v625
        %v627 = vmul.f32 %v624, %v626
        %v628 = vadd.f32 %v624, %v627
        %vm629 = vweird.f32 %v623
        %vm630 = vweird.f32 %v624
        %vm631 = vmor %vm629, %vm630
        %v632 = vsel %vm631, %v624, %v628
        %v633 = vand.u32 2147483647, %v623
        %vm634 = vcmp.eq.f32.partialorder %v633, 8.507059e+37
        %v635 = vand.u32 %v623, 2147483648
        %v636 = vor.u32 1.1754944e-38, %v635
        %v637 = vsel %vm634, %v636, %v632
        %v638 = vmul.f32 %v620, %v637
        %639 = vrot.lane.b32.xlu0 %v585, 64
        %v640 = vpop.permute.xlu0 %639
        %v643 = vsel %vm590, %v638, 0
        %645 = vmatpush.msra.mxu0 0.0
        %646 = vmatpush.msra.mxu0 0.0
        %647 = vmatpush.msra.mxu0 0.0
        %648 = vmatpush.msra.mxu0 0.0
        %649 = vmatpush.msra.mxu0 0.0
        %650 = vmatpush.msra.mxu0 0.0
        %651 = vmatpush.msra.mxu0 0.0
        %652 = vmatpush.msra.mxu0 0.0
        %653 = vmatpush.msra.mxu0 0.0
        %654 = vmatpush.msra.mxu0 0.0
        %655 = vmatpush.msra.mxu0 0.0
        %656 = vmatpush.msra.mxu0 0.0
        %657 = vmatpush.msra.mxu0 0.0
        %658 = vmatpush.msra.mxu0 0.0
        %659 = vmatpush.msra.mxu0 0.0
        %660 = vmatpush.msra.mxu0 %v640
        %661 = vmatmul.f32.gmra.mxu0 %v643
        %v662 = vpop.f32.mrf.mxu0
        %v663 = vadd.f32 0.0, %v662
        %664 = vdwg.mxu0
        %v665 = vld [vmem:[%s5] sm:$0xff]
        %666 = vrot.lane.b32.xlu0 %v585, 120
        %v667 = vpop.permute.xlu0 %666
        %668 = vrot.lane.b32.xlu0 %v585, 88
        %v669 = vpop.permute.xlu0 %668
        %v670 = vsel %vm590, %v667, 0
        %v672 = vsel %vm590, %v669, 0
        %674 = vmatpush.xpose.msra.mxu0 0.0
        %675 = vmatpush.xpose.msra.mxu0 0.0
        %676 = vmatpush.xpose.msra.mxu0 0.0
        %677 = vmatpush.xpose.msra.mxu0 0.0
        %678 = vmatpush.xpose.msra.mxu0 0.0
        %679 = vmatpush.xpose.msra.mxu0 0.0
        %680 = vmatpush.xpose.msra.mxu0 0.0
        %681 = vmatpush.xpose.msra.mxu0 0.0
        %682 = vmatpush.xpose.msra.mxu0 0.0
        %683 = vmatpush.xpose.msra.mxu0 0.0
        %684 = vmatpush.xpose.msra.mxu0 0.0
        %685 = vmatpush.xpose.msra.mxu0 0.0
        %686 = vmatpush.xpose.msra.mxu0 0.0
        %687 = vmatpush.xpose.msra.mxu0 0.0
        %688 = vmatpush.xpose.msra.mxu0 0.0
        %689 = vmatpush.xpose.msra.mxu0 %v672
        %690 = vmatmul.f32.gmra.mxu0 %v670
        %v691 = vpop.f32.mrf.mxu0
        %v692 = vadd.f32 0.0, %v691
        %693 = vdwg.mxu0
        %v694 = vsel %vm590, %v692, -inf
        %695 = vmax.xlane.f32.xlu0 %v694
        %v696 = vpop.xlane.xlu0 %695
        %v697 = vsub.f32 %v692, %v696
        %v698 = vmul.f32 %v697, 1.442695
        %v699 = vpow.pop %v698
        %v700 = vsel %vm590, %v699, 0.0
        %701 = vadd.xlane.f32.xlu0 %v700
        %v702 = vpop.xlane.xlu0 %701
        %v703 = vrcp.pop %v702
        %v704 = vmul.f32 %v702, %v703
        %v705 = vsub.f32 1.0, %v704
        %v706 = vmul.f32 %v703, %v705
        %v707 = vadd.f32 %v703, %v706
        %vm708 = vweird.f32 %v702
        %vm709 = vweird.f32 %v703
        %vm710 = vmor %vm708, %vm709
        %v711 = vsel %vm710, %v703, %v707
        %v712 = vand.u32 2147483647, %v702
        %vm713 = vcmp.eq.f32.partialorder %v712, 8.507059e+37
        %v714 = vand.u32 %v702, 2147483648
        %v715 = vor.u32 1.1754944e-38, %v714
        %v716 = vsel %vm713, %v715, %v711
        %v717 = vmul.f32 %v699, %v716
        %718 = vrot.lane.b32.xlu0 %v585, 56
        %v719 = vpop.permute.xlu0 %718
        %v722 = vsel %vm590, %v717, 0
        %724 = vmatpush.msra.mxu0 0.0
        %725 = vmatpush.msra.mxu0 0.0
        %726 = vmatpush.msra.mxu0 0.0
        %727 = vmatpush.msra.mxu0 0.0
        %728 = vmatpush.msra.mxu0 0.0
        %729 = vmatpush.msra.mxu0 0.0
        %730 = vmatpush.msra.mxu0 0.0
        %731 = vmatpush.msra.mxu0 0.0
        %732 = vmatpush.msra.mxu0 0.0
        %733 = vmatpush.msra.mxu0 0.0
        %734 = vmatpush.msra.mxu0 0.0
        %735 = vmatpush.msra.mxu0 0.0
        %736 = vmatpush.msra.mxu0 0.0
        %737 = vmatpush.msra.mxu0 0.0
        %738 = vmatpush.msra.mxu0 0.0
        %739 = vmatpush.msra.mxu0 %v719
        %740 = vmatmul.f32.gmra.mxu0 %v722
        %v741 = vpop.f32.mrf.mxu0
        %v742 = vadd.f32 0.0, %v741
        %743 = vdwg.mxu0
        %v744 = vld [vmem:[%s5 + $0x8] sm:$0xff]
        %v746 = vsel %vm590, %v742, 0
        %748 = vmatpush.msra.mxu0 0.0
        %749 = vmatpush.msra.mxu0 0.0
        %750 = vmatpush.msra.mxu0 0.0
        %751 = vmatpush.msra.mxu0 0.0
        %752 = vmatpush.msra.mxu0 0.0
        %753 = vmatpush.msra.mxu0 0.0
        %754 = vmatpush.msra.mxu0 0.0
        %755 = vmatpush.msra.mxu0 0.0
        %756 = vmatpush.msra.mxu0 0.0
        %757 = vmatpush.msra.mxu0 0.0
        %758 = vmatpush.msra.mxu0 0.0
        %759 = vmatpush.msra.mxu0 0.0
        %760 = vmatpush.msra.mxu0 0.0
        %761 = vmatpush.msra.mxu0 0.0
        %762 = vmatpush.msra.mxu0 0.0
        %763 = vmatpush.msra.mxu0 %v744
        %764 = vmatmul.f32.gmra.mxu0 %v746
        %v765 = vpop.f32.mrf.mxu0
        %v766 = vadd.f32 0.0, %v765
        %767 = vdwg.mxu0
        %v769 = vsel %vm590, %v663, 0
        %771 = vmatpush.msra.mxu0 0.0
        %772 = vmatpush.msra.mxu0 0.0
        %773 = vmatpush.msra.mxu0 0.0
        %774 = vmatpush.msra.mxu0 0.0
        %775 = vmatpush.msra.mxu0 0.0
        %776 = vmatpush.msra.mxu0 0.0
        %777 = vmatpush.msra.mxu0 0.0
        %778 = vmatpush.msra.mxu0 0.0
        %779 = vmatpush.msra.mxu0 0.0
        %780 = vmatpush.msra.mxu0 0.0
        %781 = vmatpush.msra.mxu0 0.0
        %782 = vmatpush.msra.mxu0 0.0
        %783 = vmatpush.msra.mxu0 0.0
        %784 = vmatpush.msra.mxu0 0.0
        %785 = vmatpush.msra.mxu0 0.0
        %786 = vmatpush.msra.mxu0 %v665
        %787 = vmatmul.f32.gmra.mxu0 %v769
        %v788 = vpop.f32.mrf.mxu0
        %v789 = vadd.f32 %v766, %v788
        %790 = vdwg.mxu0
        %791 = vrot.lane.b32.xlu0 %v585, 112
        %v792 = vpop.permute.xlu0 %791
        %793 = vrot.lane.b32.xlu0 %v585, 80
        %v794 = vpop.permute.xlu0 %793
        %v795 = vsel %vm590, %v792, 0
        %v797 = vsel %vm590, %v794, 0
        %799 = vmatpush.xpose.msra.mxu0 0.0
        %800 = vmatpush.xpose.msra.mxu0 0.0
        %801 = vmatpush.xpose.msra.mxu0 0.0
        %802 = vmatpush.xpose.msra.mxu0 0.0
        %803 = vmatpush.xpose.msra.mxu0 0.0
        %804 = vmatpush.xpose.msra.mxu0 0.0
        %805 = vmatpush.xpose.msra.mxu0 0.0
        %806 = vmatpush.xpose.msra.mxu0 0.0
        %807 = vmatpush.xpose.msra.mxu0 0.0
        %808 = vmatpush.xpose.msra.mxu0 0.0
        %809 = vmatpush.xpose.msra.mxu0 0.0
        %810 = vmatpush.xpose.msra.mxu0 0.0
        %811 = vmatpush.xpose.msra.mxu0 0.0
        %812 = vmatpush.xpose.msra.mxu0 0.0
        %813 = vmatpush.xpose.msra.mxu0 0.0
        %814 = vmatpush.xpose.msra.mxu0 %v797
        %815 = vmatmul.f32.gmra.mxu0 %v795
        %v816 = vpop.f32.mrf.mxu0
        %v817 = vadd.f32 0.0, %v816
        %818 = vdwg.mxu0
        %v819 = vsel %vm590, %v817, -inf
        %820 = vmax.xlane.f32.xlu0 %v819
        %v821 = vpop.xlane.xlu0 %820
        %v822 = vsub.f32 %v817, %v821
        %v823 = vmul.f32 %v822, 1.442695
        %v824 = vpow.pop %v823
        %v825 = vsel %vm590, %v824, 0.0
        %826 = vadd.xlane.f32.xlu0 %v825
        %v827 = vpop.xlane.xlu0 %826
        %v828 = vrcp.pop %v827
        %v829 = vmul.f32 %v827, %v828
        %v830 = vsub.f32 1.0, %v829
        %v831 = vmul.f32 %v828, %v830
        %v832 = vadd.f32 %v828, %v831
        %vm833 = vweird.f32 %v827
        %vm834 = vweird.f32 %v828
        %vm835 = vmor %vm833, %vm834
        %v836 = vsel %vm835, %v828, %v832
        %v837 = vand.u32 2147483647, %v827
        %vm838 = vcmp.eq.f32.partialorder %v837, 8.507059e+37
        %v839 = vand.u32 %v827, 2147483648
        %v840 = vor.u32 1.1754944e-38, %v839
        %v841 = vsel %vm838, %v840, %v836
        %v842 = vmul.f32 %v824, %v841
        %843 = vrot.lane.b32.xlu0 %v585, 48
        %v844 = vpop.permute.xlu0 %843
        %v847 = vsel %vm590, %v842, 0
        %849 = vmatpush.msra.mxu0 0.0
        %850 = vmatpush.msra.mxu0 0.0
        %851 = vmatpush.msra.mxu0 0.0
        %852 = vmatpush.msra.mxu0 0.0
        %853 = vmatpush.msra.mxu0 0.0
        %854 = vmatpush.msra.mxu0 0.0
        %855 = vmatpush.msra.mxu0 0.0
        %856 = vmatpush.msra.mxu0 0.0
        %857 = vmatpush.msra.mxu0 0.0
        %858 = vmatpush.msra.mxu0 0.0
        %859 = vmatpush.msra.mxu0 0.0
        %860 = vmatpush.msra.mxu0 0.0
        %861 = vmatpush.msra.mxu0 0.0
        %862 = vmatpush.msra.mxu0 0.0
        %863 = vmatpush.msra.mxu0 0.0
        %864 = vmatpush.msra.mxu0 %v844
        %865 = vmatmul.f32.gmra.mxu0 %v847
        %v866 = vpop.f32.mrf.mxu0
        %v867 = vadd.f32 0.0, %v866
        %868 = vdwg.mxu0
        %v869 = vld [vmem:[%s5 + $0x10] sm:$0xff]
        %v871 = vsel %vm590, %v867, 0
        %873 = vmatpush.msra.mxu0 0.0
        %874 = vmatpush.msra.mxu0 0.0
        %875 = vmatpush.msra.mxu0 0.0
        %876 = vmatpush.msra.mxu0 0.0
        %877 = vmatpush.msra.mxu0 0.0
        %878 = vmatpush.msra.mxu0 0.0
        %879 = vmatpush.msra.mxu0 0.0
        %880 = vmatpush.msra.mxu0 0.0
        %881 = vmatpush.msra.mxu0 0.0
        %882 = vmatpush.msra.mxu0 0.0
        %883 = vmatpush.msra.mxu0 0.0
        %884 = vmatpush.msra.mxu0 0.0
        %885 = vmatpush.msra.mxu0 0.0
        %886 = vmatpush.msra.mxu0 0.0
        %887 = vmatpush.msra.mxu0 0.0
        %888 = vmatpush.msra.mxu0 %v869
        %889 = vmatmul.f32.gmra.mxu0 %v871
        %v890 = vpop.f32.mrf.mxu0
        %v891 = vadd.f32 0.0, %v890
        %892 = vdwg.mxu0
        %v893 = vadd.f32 %v789, %v891
        %894 = vrot.lane.b32.xlu0 %v585, 104
        %v895 = vpop.permute.xlu0 %894
        %896 = vrot.lane.b32.xlu0 %v585, 72
        %v897 = vpop.permute.xlu0 %896
        %v898 = vsel %vm590, %v895, 0
        %v900 = vsel %vm590, %v897, 0
        %902 = vmatpush.xpose.msra.mxu0 0.0
        %903 = vmatpush.xpose.msra.mxu0 0.0
        %904 = vmatpush.xpose.msra.mxu0 0.0
        %905 = vmatpush.xpose.msra.mxu0 0.0
        %906 = vmatpush.xpose.msra.mxu0 0.0
        %907 = vmatpush.xpose.msra.mxu0 0.0
        %908 = vmatpush.xpose.msra.mxu0 0.0
        %909 = vmatpush.xpose.msra.mxu0 0.0
        %910 = vmatpush.xpose.msra.mxu0 0.0
        %911 = vmatpush.xpose.msra.mxu0 0.0
        %912 = vmatpush.xpose.msra.mxu0 0.0
        %913 = vmatpush.xpose.msra.mxu0 0.0
        %914 = vmatpush.xpose.msra.mxu0 0.0
        %915 = vmatpush.xpose.msra.mxu0 0.0
        %916 = vmatpush.xpose.msra.mxu0 0.0
        %917 = vmatpush.xpose.msra.mxu0 %v900
        %918 = vmatmul.f32.gmra.mxu0 %v898
        %v919 = vpop.f32.mrf.mxu0
        %v920 = vadd.f32 0.0, %v919
        %921 = vdwg.mxu0
        %v922 = vsel %vm590, %v920, -inf
        %923 = vmax.xlane.f32.xlu0 %v922
        %v924 = vpop.xlane.xlu0 %923
        %v925 = vsub.f32 %v920, %v924
        %v926 = vmul.f32 %v925, 1.442695
        %v927 = vpow.pop %v926
        %v928 = vsel %vm590, %v927, 0.0
        %929 = vadd.xlane.f32.xlu0 %v928
        %v930 = vpop.xlane.xlu0 %929
        %v931 = vrcp.pop %v930
        %v932 = vmul.f32 %v930, %v931
        %v933 = vsub.f32 1.0, %v932
        %v934 = vmul.f32 %v931, %v933
        %v935 = vadd.f32 %v931, %v934
        %vm936 = vweird.f32 %v930
        %vm937 = vweird.f32 %v931
        %vm938 = vmor %vm936, %vm937
        %v939 = vsel %vm938, %v931, %v935
        %v940 = vand.u32 2147483647, %v930
        %vm941 = vcmp.eq.f32.partialorder %v940, 8.507059e+37
        %v942 = vand.u32 %v930, 2147483648
        %v943 = vor.u32 1.1754944e-38, %v942
        %v944 = vsel %vm941, %v943, %v939
        %v945 = vmul.f32 %v927, %v944
        %946 = vrot.lane.b32.xlu0 %v585, 40
        %v947 = vpop.permute.xlu0 %946
        %v950 = vsel %vm590, %v945, 0
        %952 = vmatpush.msra.mxu0 0.0
        %953 = vmatpush.msra.mxu0 0.0
        %954 = vmatpush.msra.mxu0 0.0
        %955 = vmatpush.msra.mxu0 0.0
        %956 = vmatpush.msra.mxu0 0.0
        %957 = vmatpush.msra.mxu0 0.0
        %958 = vmatpush.msra.mxu0 0.0
        %959 = vmatpush.msra.mxu0 0.0
        %960 = vmatpush.msra.mxu0 0.0
        %961 = vmatpush.msra.mxu0 0.0
        %962 = vmatpush.msra.mxu0 0.0
        %963 = vmatpush.msra.mxu0 0.0
        %964 = vmatpush.msra.mxu0 0.0
        %965 = vmatpush.msra.mxu0 0.0
        %966 = vmatpush.msra.mxu0 0.0
        %967 = vmatpush.msra.mxu0 %v947
        %968 = vmatmul.f32.gmra.mxu0 %v950
        %v969 = vpop.f32.mrf.mxu0
        %v970 = vadd.f32 0.0, %v969
        %971 = vdwg.mxu0
        %v972 = vld [vmem:[%s5 + $0x18] sm:$0xff]
        %v974 = vsel %vm590, %v970, 0
        %976 = vmatpush.msra.mxu0 0.0
        %977 = vmatpush.msra.mxu0 0.0
        %978 = vmatpush.msra.mxu0 0.0
        %979 = vmatpush.msra.mxu0 0.0
        %980 = vmatpush.msra.mxu0 0.0
        %981 = vmatpush.msra.mxu0 0.0
        %982 = vmatpush.msra.mxu0 0.0
        %983 = vmatpush.msra.mxu0 0.0
        %984 = vmatpush.msra.mxu0 0.0
        %985 = vmatpush.msra.mxu0 0.0
        %986 = vmatpush.msra.mxu0 0.0
        %987 = vmatpush.msra.mxu0 0.0
        %988 = vmatpush.msra.mxu0 0.0
        %989 = vmatpush.msra.mxu0 0.0
        %990 = vmatpush.msra.mxu0 0.0
        %991 = vmatpush.msra.mxu0 %v972
        %992 = vmatmul.f32.gmra.mxu0 %v974
        %v993 = vpop.f32.mrf.mxu0
        %v994 = vadd.f32 0.0, %v993
        %995 = vdwg.mxu0
        %v996 = vadd.f32 %v893, %v994
        %v997 = vadd.f32 %v512, %v996
        %v998 = vld [vmem:[%s6] sm:$0x1]
        %v1000 = vperm.slane %v998, 0
        %v1002 = vadd.f32 %v997, %v1000
        %v1003 = vld [vmem:[%s7] sm:$0x1]
        %v1004 = vld [vmem:[%s8] sm:$0x1]
        %v1005 = vsel %vm515, %v1002, 0.0
        %1006 = vadd.xlane.f32.xlu0 %v1005
        %v1007 = vpop.xlane.xlu0 %1006
        %v1008 = vmul.f32 %v1007, %v525
        %v1009 = vmul.f32 %v1002, %v1002
        %v1010 = vsel %vm515, %v1009, 0.0
        %1011 = vadd.xlane.f32.xlu0 %v1010
        %v1012 = vpop.xlane.xlu0 %1011
        %v1013 = vmul.f32 %v1012, %v525
        %v1014 = vmul.f32 %v1008, %v1008
        %v1015 = vsub.f32 %v1013, %v1014
        %v1016 = vmax.f32 %v1015, 0.0
        %v1017 = vsub.f32 %v1002, %v1008
        %v1018 = vadd.f32 %v1016, 1e-05
        %v1019 = vrsqrt.pop %v1018
        %v1020 = vmul.f32 %v1019, %v1018
        %v1021 = vmul.f32 %v1020, %v1019
        %v1022 = vmul.f32 0.5, %v1021
        %v1023 = vsub.f32 1.5, %v1022
        %v1024 = vmul.f32 %v1019, %v1023
        %vm1025 = vweird.f32 %v1018
        %vm1026 = vweird.f32 %v1019
        %vm1027 = vmor %vm1025, %vm1026
        %v1028 = vsel %vm1027, %v1019, %v1024
        %v1029 = vmul.f32 %v1017, %v1028
        %v1031 = vperm.slane %v1003, 0
        %v1033 = vmul.f32 %v1029, %v1031
        %v1035 = vperm.slane %v1004, 0
        %v1037 = vadd.f32 %v1033, %v1035
        %v1038 = vld [vmem:[%s9] sm:$0x1]
        %v1039 = vld [vmem:[%s10] sm:$0x1]
        %v1040 = vsel %vm515, %v1037, 0.0
        %1041 = vadd.xlane.f32.xlu0 %v1040
        %v1042 = vpop.xlane.xlu0 %1041
        %v1043 = vmul.f32 %v1042, %v525
        %v1044 = vmul.f32 %v1037, %v1037
        %v1045 = vsel %vm515, %v1044, 0.0
        %1046 = vadd.xlane.f32.xlu0 %v1045
        %v1047 = vpop.xlane.xlu0 %1046
        %v1048 = vmul.f32 %v1047, %v525
        %v1049 = vmul.f32 %v1043, %v1043
        %v1050 = vsub.f32 %v1048, %v1049
        %v1051 = vmax.f32 %v1050, 0.0
        %v1052 = vsub.f32 %v1037, %v1043
        %v1053 = vadd.f32 %v1051, 1e-05
        %v1054 = vrsqrt.pop %v1053
        %v1055 = vmul.f32 %v1054, %v1053
        %v1056 = vmul.f32 %v1055, %v1054
        %v1057 = vmul.f32 0.5, %v1056
        %v1058 = vsub.f32 1.5, %v1057
        %v1059 = vmul.f32 %v1054, %v1058
        %vm1060 = vweird.f32 %v1053
        %vm1061 = vweird.f32 %v1054
        %vm1062 = vmor %vm1060, %vm1061
        %v1063 = vsel %vm1062, %v1054, %v1059
        %v1064 = vmul.f32 %v1052, %v1063
        %v1066 = vperm.slane %v1038, 0
        %v1068 = vmul.f32 %v1064, %v1066
        %v1070 = vperm.slane %v1039, 0
        %v1072 = vadd.f32 %v1068, %v1070
        %v1073 = vld [vmem:[%s11] sm:$0xff]
        %v1074 = vld [vmem:[%s11 + $0x8] sm:$0xff]
        %v1075 = vld [vmem:[%s11 + $0x10] sm:$0xff]
        %v1076 = vld [vmem:[%s11 + $0x18] sm:$0xff]
        %v1077 = vld [vmem:[%s12] sm:$0x1]
        %v1079 = vperm.slane %v1077, 0
        %v1082 = vsel %vm515, %v1072, 0
        %1084 = vmatpush.msra.mxu0 0.0
        %1085 = vmatpush.msra.mxu0 0.0
        %1086 = vmatpush.msra.mxu0 0.0
        %1087 = vmatpush.msra.mxu0 0.0
        %1088 = vmatpush.msra.mxu0 0.0
        %1089 = vmatpush.msra.mxu0 0.0
        %1090 = vmatpush.msra.mxu0 0.0
        %1091 = vmatpush.msra.mxu0 0.0
        %1092 = vmatpush.msra.mxu0 0.0
        %1093 = vmatpush.msra.mxu0 0.0
        %1094 = vmatpush.msra.mxu0 0.0
        %1095 = vmatpush.msra.mxu0 0.0
        %1096 = vmatpush.msra.mxu0 %v1076
        %1097 = vmatpush.msra.mxu0 %v1075
        %1098 = vmatpush.msra.mxu0 %v1074
        %1099 = vmatpush.msra.mxu0 %v1073
        %1100 = vmatmul.f32.gmra.mxu0 %v1082
        %v1101 = vpop.f32.mrf.mxu0
        %v1102 = vadd.f32 %v1079, %v1101
        %1103 = vdwg.mxu0
        %v1104 = vmul.f32 %v1102, 0.5
        %v1105 = vrcp.pop 1.4142135
        %v1106 = vmul.f32 1.4142135, %v1105
        %v1107 = vsub.f32 1.0, %v1106
        %v1108 = vmul.f32 %v1105, %v1107
        %v1109 = vadd.f32 %v1105, %v1108
        %vm1110 = vweird.f32 %v1105
        %v1111 = vsel %vm1110, %v1105, %v1109
        %v1112 = vmul.f32 %v1102, %v1111
        %v1113 = vand.u32 2147483647, %v1112
        %v1114 = vmul.f32 %v1113, 0.3275911
        %v1115 = vadd.f32 %v1114, 1.0
        %v1116 = vrcp.pop %v1115
        %v1117 = vmul.f32 %v1115, %v1116
        %v1118 = vsub.f32 1.0, %v1117
        %v1119 = vmul.f32 %v1116, %v1118
        %v1120 = vadd.f32 %v1116, %v1119
        %vm1121 = vweird.f32 %v1115
        %vm1122 = vweird.f32 %v1116
        %vm1123 = vmor %vm1121, %vm1122
        %v1124 = vsel %vm1123, %v1116, %v1120
        %v1125 = vand.u32 2147483647, %v1115
        %vm1126 = vcmp.eq.f32.partialorder %v1125, 8.507059e+37
        %v1127 = vand.u32 %v1115, 2147483648
        %v1128 = vor.u32 1.1754944e-38, %v1127
        %v1129 = vsel %vm1126, %v1128, %v1124
        %v1130 = vmul.f32 1.0, %v1129
        %v1131 = vmul.f32 %v1130, 1.0614054
        %v1132 = vadd.f32 %v1131, -1.4531521
        %v1133 = vmul.f32 %v1132, %v1130
        %v1134 = vadd.f32 %v1133, 1.4214138
        %v1135 = vmul.f32 %v1134, %v1130
        %v1136 = vadd.f32 %v1135, -0.28449672
        %v1137 = vmul.f32 %v1136, %v1130
        %v1138 = vadd.f32 %v1137, 0.2548296
        %v1139 = vmul.f32 %v1138, %v1130
        %v1140 = vsub.f32 0.0, %v1113
        %v1141 = vmul.f32 %v1140, %v1113
        %v1142 = vmul.f32 %v1141, 1.442695
        %v1143 = vpow.pop %v1142
        %v1144 = vmul.f32 %v1139, %v1143
        %v1145 = vsub.f32 1.0, %v1144
        %vm1146 = vcmp.lt.f32.partialorder %v1112, 0.0
        %v1147 = vsub.f32 0.0, %v1145
        %v1148 = vsel %vm1146, %v1147, %v1145
        %v1149 = vadd.f32 %v1148, 1.0
        %v1150 = vmul.f32 %v1104, %v1149
        %v1151 = vld [vmem:[%s13] sm:$0xff]
        %v1152 = vld [vmem:[%s13 + $0x8] sm:$0xff]
        %v1153 = vld [vmem:[%s13 + $0x10] sm:$0xff]
        %v1154 = vld [vmem:[%s13 + $0x18] sm:$0xff]
        %v1155 = vld [vmem:[%s13 + $0x20] sm:$0xff]
        %v1156 = vld [vmem:[%s13 + $0x28] sm:$0xff]
        %v1157 = vld [vmem:[%s13 + $0x30] sm:$0xff]
        %v1158 = vld [vmem:[%s13 + $0x38] sm:$0xff]
        %v1159 = vld [vmem:[%s13 + $0x40] sm:$0xff]
        %v1160 = vld [vmem:[%s13 + $0x48] sm:$0xff]
        %v1161 = vld [vmem:[%s13 + $0x50] sm:$0xff]
        %v1162 = vld [vmem:[%s13 + $0x58] sm:$0xff]
        %v1163 = vld [vmem:[%s13 + $0x60] sm:$0xff]
        %v1164 = vld [vmem:[%s13 + $0x68] sm:$0xff]
        %v1165 = vld [vmem:[%s13 + $0x70] sm:$0xff]
        %v1166 = vld [vmem:[%s13 + $0x78] sm:$0xff]
        %v1167 = vld [vmem:[%s14] sm:$0x1]
        %v1169 = vperm.slane %v1167, 0
        %1171 = vmatpush.msra.mxu0 %v1166
        %1172 = vmatpush.msra.mxu0 %v1165
        %1173 = vmatpush.msra.mxu0 %v1164
        %1174 = vmatpush.msra.mxu0 %v1163
        %1175 = vmatpush.msra.mxu0 %v1162
        %1176 = vmatpush.msra.mxu0 %v1161
        %1177 = vmatpush.msra.mxu0 %v1160
        %1178 = vmatpush.msra.mxu0 %v1159
        %1179 = vmatpush.msra.mxu0 %v1158
        %1180 = vmatpush.msra.mxu0 %v1157
        %1181 = vmatpush.msra.mxu0 %v1156
        %1182 = vmatpush.msra.mxu0 %v1155
        %1183 = vmatpush.msra.mxu0 %v1154
        %1184 = vmatpush.msra.mxu0 %v1153
        %1185 = vmatpush.msra.mxu0 %v1152
        %1186 = vmatpush.msra.mxu0 %v1151
        %1187 = vmatmul.f32.gmra.mxu0 %v1150
        %v1188 = vpop.f32.mrf.mxu0
        %v1189 = vadd.f32 %v1169, %v1188
        %1190 = vdwg.mxu0
        %v1191 = vmul.f32 %v1189, 0.5
        %v1192 = vmul.f32 %v1189, %v1111
        %v1193 = vand.u32 2147483647, %v1192
        %v1194 = vmul.f32 %v1193, 0.3275911
        %v1195 = vadd.f32 %v1194, 1.0
        %v1196 = vrcp.pop %v1195
        %v1197 = vmul.f32 %v1195, %v1196
        %v1198 = vsub.f32 1.0, %v1197
        %v1199 = vmul.f32 %v1196, %v1198
        %v1200 = vadd.f32 %v1196, %v1199
        %vm1201 = vweird.f32 %v1195
        %vm1202 = vweird.f32 %v1196
        %vm1203 = vmor %vm1201, %vm1202
        %v1204 = vsel %vm1203, %v1196, %v1200
        %v1205 = vand.u32 2147483647, %v1195
        %vm1206 = vcmp.eq.f32.partialorder %v1205, 8.507059e+37
        %v1207 = vand.u32 %v1195, 2147483648
        %v1208 = vor.u32 1.1754944e-38, %v1207
        %v1209 = vsel %vm1206, %v1208, %v1204
        %v1210 = vmul.f32 1.0, %v1209
        %v1211 = vmul.f32 %v1210, 1.0614054
        %v1212 = vadd.f32 %v1211, -1.4531521
        %v1213 = vmul.f32 %v1212, %v1210
        %v1214 = vadd.f32 %v1213, 1.4214138
        %v1215 = vmul.f32 %v1214, %v1210
        %v1216 = vadd.f32 %v1215, -0.28449672
        %v1217 = vmul.f32 %v1216, %v1210
        %v1218 = vadd.f32 %v1217, 0.2548296
        %v1219 = vmul.f32 %v1218, %v1210
        %v1220 = vsub.f32 0.0, %v1193
        %v1221 = vmul.f32 %v1220, %v1193
        %v1222 = vmul.f32 %v1221, 1.442695
        %v1223 = vpow.pop %v1222
        %v1224 = vmul.f32 %v1219, %v1223
        %v1225 = vsub.f32 1.0, %v1224
        %vm1226 = vcmp.lt.f32.partialorder %v1192, 0.0
        %v1227 = vsub.f32 0.0, %v1225
        %v1228 = vsel %vm1226, %v1227, %v1225
        %v1229 = vadd.f32 %v1228, 1.0
        %v1230 = vmul.f32 %v1191, %v1229
        %v1231 = vadd.f32 %v1002, %v1230
        %1232 = vst.msk [vmem:[%s511] sm:$0xff] %vm515, %v1231
        %s1233 = sand.u32 %s360, 1
        %s1234 = scalar_lea.sflag [#allocation4], %s1233
        %s1235 = sand.u32 %s360, 1
        %s1236 = smul.addr %s1235, 8
        %s1237 = scalar_lea.vmem [#allocation5], %s1236
        // Predicated region
        $region85: #{tpu_custom_call.1} parent=79 // pred_check
          %p1238 = pneg %p370
        $region86: #{tpu_custom_call.1} parent=79 // pred_check_branch
          %1240 = sbr.rel (%p1238) target = $region88
        $region87: #{tpu_custom_call.1} parent=79 // pred_region
          %1242 = vsyncadd %s1234, 0
          %s1243 = smul.addr %s32, 8
          %s1244 = scalar_lea.hbm %s15, %s1243
          %s1246 = sshll.u32 %s1237, 4
          %s1247 = int_to_ptr.vmem [resolvable:$true] %s1246
          %s1248 = sshll.u32 %s1244, 4
          %s1249 = int_to_ptr.hbm [resolvable:$true] %s1248
          %1251 = dma.vmem_to_hbm [thread:$0]  %s1247, 128, %s1249, %s1234
        $region88: #{tpu_custom_call.1} parent=79 // pred_fallthru
          _
      $region80: #{tpu_custom_call.1} parent=5 // pred_fallthru
        _
      %p1252 = scmp.le.s32.totalorder 2, %s27
      // Predicated region
      $region89: #{tpu_custom_call.1} parent=5 // pred_check
        %p1253 = pneg %p1252
      $region90: #{tpu_custom_call.1} parent=5 // pred_check_branch
        %1255 = sbr.rel (%p1253) target = $region92
      $region91: #{tpu_custom_call.1} parent=5 // pred_region
        %s1256 = ssub.s32 %s27, 2
        // Predicated region
        $region93: #{tpu_custom_call.1} parent=91 // pred_check
          %p1257 = pneg %p376
        $region94: #{tpu_custom_call.1} parent=91 // pred_check_branch
          %1259 = sbr.rel (%p1257) target = $region96
        $region95: #{tpu_custom_call.1} parent=91 // pred_region
          %s1260 = sand.u32 %s361, 1
          %s1261 = scalar_lea.sflag [#allocation4], %s1260
          %s1262 = sand.u32 %s361, 1
          %s1263 = smul.addr %s1262, 8
          %s1264 = scalar_lea.vmem [#allocation5], %s1263
          %1266 = dma.done %s1261, 128
        $region96: #{tpu_custom_call.1} parent=91 // pred_fallthru
          _
      $region92: #{tpu_custom_call.1} parent=5 // pred_fallthru
        _
    $region6: #{tpu_custom_call.1} parent=1 // loop_footer
      %s31 = sadd.s32 1, %s27
    $region7: #{tpu_custom_call.1} parent=1 // loop_footer_branch
      %26 = sbr.rel target = $region3
    $region8: #{tpu_custom_call.1} parent=1 // loop_exit
      _
    %1267 = vsyncpa [#allocation3], 1
    %s1268 = scalar_lea.sflag [#allocation3], 1
    %1269 = vsyncpa %s1268, 1
    %1270 = vsyncpa [#allocation4], 1
    %s1271 = scalar_lea.sflag [#allocation4], 1
    %1272 = vsyncpa %s1271, 1

</llo_original>
